<compile_context>
chip_gen: v5e
topology: v5e:2x2
jax: 0.10.0
libtpu: 0.0.40
codegen_flags: <defaults>
</compile_context>

<pallas_src>
import functools
import math

import jax
import jax.numpy as jnp
from jax.experimental import pallas as pl
from jax.experimental.pallas import tpu as pltpu


# ----------------------------- fused kernel ---------------------------------

def transformer_block_kernel(x_ref, m_ref,
                             g1_ref, be1_ref,
                             wq_ref, bq_ref, wk_ref, bk_ref, wv_ref, bv_ref,
                             wo_ref, bo_ref,
                             g2_ref, be2_ref,
                             w1_ref, b1_ref, w2_ref, b2_ref,
                             o_ref, attn_scr,
                             *, num_head, head_dim, batch_tile, seq_len):
    H, Dh, Bt, S = num_head, head_dim, batch_tile, seq_len
    f32, bf16 = jnp.float32, jnp.bfloat16

    x = x_ref[...].astype(f32)                 # [Bt*S, D]  (batch rows flattened)
    mask = m_ref[...].astype(f32)              # [Bt, S]    (1 = valid, 0 = pad)
    neg = 1e6 * (1.0 - mask)                   # [Bt, S]

    def layernorm(v, g, b):                    # PyTorch LayerNorm, eps=1e-5
        mu = jnp.mean(v, axis=-1, keepdims=True)
        vc = v - mu
        var = jnp.mean(vc * vc, axis=-1, keepdims=True)
        return vc * jax.lax.rsqrt(var + 1e-5) * g + b

    # ---------------- MHA sublayer ----------------
    xn1 = layernorm(x, g1_ref[...], be1_ref[...])
    xn1_b = xn1.astype(bf16)                   # bf16 only at the MXU boundary
    scale = 1.0 / math.sqrt(Dh)

    for h in range(H):                         # static loop over heads
        # Per-head projections: weights indexed along the leading axis of the
        # (H, D, Dh) refs -> no sub-128-lane activation slicing, no concat.
        qh = (jnp.dot(xn1_b, wq_ref[h], preferred_element_type=f32)
              + bq_ref[h]).astype(bf16)        # [Bt*S, Dh]
        kh = (jnp.dot(xn1_b, wk_ref[h], preferred_element_type=f32)
              + bk_ref[h]).astype(bf16)
        vh = (jnp.dot(xn1_b, wv_ref[h], preferred_element_type=f32)
              + bv_ref[h]).astype(bf16)

        for b in range(Bt):                    # static loop over batch items
            r0 = b * S                         # sublane-aligned row offset
            qb = qh[r0:r0 + S, :]
            kb = kh[r0:r0 + S, :]
            vb = vh[r0:r0 + S, :]
            s = jax.lax.dot_general(qb, kb, (((1,), (1,)), ((), ())),
                                    preferred_element_type=f32) * scale   # [S, S]
            s = s - neg[b:b + 1, :]            # mask along the key axis
            s = s - jnp.max(s, axis=-1, keepdims=True)
            p = jnp.exp(s)
            p = p * pl.reciprocal(jnp.sum(p, axis=-1, keepdims=True), approx=True)
            pv = jnp.dot(p.astype(bf16), vb, preferred_element_type=f32)  # [S, Dh]
            # Write this head's output straight into the VMEM accumulator.
            attn_scr[r0:r0 + S, h * Dh:(h + 1) * Dh] = pv

    # output projection + (dropout = identity) + residual
    attn_b = attn_scr[...].astype(bf16)        # [Bt*S, H*Dh]
    x1 = (jnp.dot(attn_b, wo_ref[...], preferred_element_type=f32)
          + bo_ref[...] + x)

    # ---------------- MLP sublayer ----------------
    xn2 = layernorm(x1, g2_ref[...], be2_ref[...])
    h1 = (jnp.dot(xn2.astype(bf16), w1_ref[...], preferred_element_type=f32)
          + b1_ref[...])
    # tanh-GELU (EUP); PyTorch reference uses exact erf -> <1e-3 abs deviation.
    h1 = jax.nn.gelu(h1, approximate=True)
    x2 = (jnp.dot(h1.astype(bf16), w2_ref[...], preferred_element_type=f32)
          + b2_ref[...] + x1)

    o_ref[...] = x2.astype(o_ref.dtype)


# ----------------------------- wrapper ---------------------------------------

def transformer_forward(params, X, mask, batch_tile=None):
    B, S, D = X.shape
    H, Dh = params["num_head"], params["head_dim"]
    HD = H * Dh
    hidden = params["w1"].shape[1]

    Bt = B if batch_tile is None else batch_tile
    assert B % Bt == 0
    nb = B // Bt                               # grid size (1 at these shapes)

    bf16 = jnp.bfloat16
    # Per-head weight layout (H, D, Dh): wX3[h] == wX[:, h*Dh:(h+1)*Dh].
    wq3 = params["wq"].reshape(D, H, Dh).transpose(1, 0, 2).astype(bf16)
    wk3 = params["wk"].reshape(D, H, Dh).transpose(1, 0, 2).astype(bf16)
    wv3 = params["wv"].reshape(D, H, Dh).transpose(1, 0, 2).astype(bf16)
    bq3 = params["bq"].reshape(H, 1, Dh)
    bk3 = params["bk"].reshape(H, 1, Dh)
    bv3 = params["bv"].reshape(H, 1, Dh)
    wo = params["wo"].astype(bf16)
    w1 = params["w1"].astype(bf16)
    w2 = params["w2"].astype(bf16)
    bo = params["bo"].reshape(1, D)
    b1 = params["b1"].reshape(1, hidden)
    b2 = params["b2"].reshape(1, D)
    g1 = params["ln1_g"].reshape(1, D)
    be1 = params["ln1_b"].reshape(1, D)
    g2 = params["ln2_g"].reshape(1, D)
    be2 = params["ln2_b"].reshape(1, D)

    X2 = X.reshape(B * S, D)                   # free wrapper-side reshape
    maskf = mask.astype(jnp.float32)

    def rep(arr):                              # full array, replicated over grid
        nd = arr.ndim
        return pl.BlockSpec(arr.shape, lambda i: (0,) * nd)

    kernel = functools.partial(transformer_block_kernel,
                               num_head=H, head_dim=Dh,
                               batch_tile=Bt, seq_len=S)

    out2 = pl.pallas_call(
        kernel,
        out_shape=jax.ShapeDtypeStruct((B * S, D), X.dtype),
        grid=(nb,),
        in_specs=[
            pl.BlockSpec((Bt * S, D), lambda i: (i, 0)),   # X (rows flattened)
            pl.BlockSpec((Bt, S), lambda i: (i, 0)),       # mask
            rep(g1), rep(be1),
            rep(wq3), rep(bq3), rep(wk3), rep(bk3), rep(wv3), rep(bv3),
            rep(wo), rep(bo),
            rep(g2), rep(be2),
            rep(w1), rep(b1), rep(w2), rep(b2),
        ],
        out_specs=pl.BlockSpec((Bt * S, D), lambda i: (i, 0)),
        scratch_shapes=[pltpu.VMEM((Bt * S, HD), jnp.float32)],   # attn accumulator
        compiler_params=pltpu.CompilerParams(
            dimension_semantics=("arbitrary",)),
    )(X2, maskf, g1, be1, wq3, bq3, wk3, bk3, wv3, bv3, wo, bo,
      g2, be2, w1, b1, w2, b2)

    return out2.reshape(B, S, D)


# ----------------------------- reference (plain JAX) --------------------------

def transformer_reference(params, X, mask):
    B, S, D = X.shape
    H, Dh = params["num_head"], params["head_dim"]

    def ln(v, g, b):
        mu = jnp.mean(v, -1, keepdims=True)
        var = jnp.mean((v - mu) ** 2, -1, keepdims=True)
        return (v - mu) / jnp.sqrt(var + 1e-5) * g + b

    xn1 = ln(X, params["ln1_g"], params["ln1_b"])
    q = xn1 @ params["wq"] + params["bq"]
    k = xn1 @ params["wk"] + params["bk"]
    v = xn1 @ params["wv"] + params["bv"]

    def split(t):
        return t.reshape(B, S, H, Dh).transpose(0, 2, 1, 3)

    q, k, v = split(q), split(k), split(v)
    scores = jnp.einsum("bhqd,bhkd->bhqk", q, k) / math.sqrt(Dh)
    scores = scores - 1e6 * (1.0 - mask[:, None, None, :])
    p = jax.nn.softmax(scores, axis=-1)
    attn = jnp.einsum("bhqk,bhkd->bhqd", p, v).transpose(0, 2, 1, 3).reshape(B, S, H * Dh)
    x1 = attn @ params["wo"] + params["bo"] + X
    xn2 = ln(x1, params["ln2_g"], params["ln2_b"])
    h = jax.nn.gelu(xn2 @ params["w1"] + params["b1"], approximate=False)
    return h @ params["w2"] + params["b2"] + x1


# ----------------------------- params ----------------------------------------

def init_params(key, dim, num_head, head_dim, hidden_dim):
    ks = jax.random.split(key, 6)
    s = 0.02

    def lin(k, fan_in, fan_out):
        kw, kb = jax.random.split(k)
        return (jax.random.normal(kw, (fan_in, fan_out), jnp.float32) * s,
                jax.random.normal(kb, (fan_out,), jnp.float32) * s)

    wq, bq = lin(ks[0], dim, num_head * head_dim)
    wk, bk = lin(ks[1], dim, num_head * head_dim)
    wv, bv = lin(ks[2], dim, num_head * head_dim)
    wo, bo = lin(ks[3], num_head * head_dim, dim)
    w1, b1 = lin(ks[4], dim, hidden_dim)
    w2, b2 = lin(ks[5], hidden_dim, dim)
    return dict(
        num_head=num_head, head_dim=head_dim,
        ln1_g=jnp.ones((dim,), jnp.float32), ln1_b=jnp.zeros((dim,), jnp.float32),
        ln2_g=jnp.ones((dim,), jnp.float32), ln2_b=jnp.zeros((dim,), jnp.float32),
        wq=wq, bq=bq, wk=wk, bk=bk, wv=wv, bv=bv, wo=wo, bo=bo,
        w1=w1, b1=b1, w2=w2, b2=b2,
    )


# ----------------------------- main -------------------------------------------

if __name__ == "__main__":
    # config: transformer_dim=32, num_head=2, head_dim=16, transformer_hidden_dim=64
    B, S, D = 2, 8, 32
    H, Dh, Hd = 2, 16, 64

    key = jax.random.PRNGKey(0)
    kx, kp = jax.random.split(key)
    X = jax.random.normal(kx, (B, S, D), jnp.float32)
    # mask: batch 0 fully valid, batch 1 has the last 2 positions padded
    mask = jnp.ones((B, S), jnp.float32).at[1, -2:].set(0.0)

    params = init_params(kp, D, H, Dh, Hd)

    fwd = jax.jit(functools.partial(transformer_forward, params))
    out = fwd(X, mask)
    jax.block_until_ready(out)

    assert out.shape == (B, S, D) and out.dtype == jnp.float32
    assert bool(jnp.all(jnp.isfinite(out)))

    # correctness vs. plain-JAX f32 reference (tolerance covers bf16 MXU
    # operands, approx reciprocal in softmax, tanh-GELU)
    ref = transformer_reference(params, X, mask)
    assert bool(jnp.allclose(out, ref, rtol=2e-2, atol=5e-3)), "mismatch vs reference"

    print("KERNEL_OK")
</pallas_src>

<mosaic_0001>
module attributes {stable_mosaic.version = 11 : i64} {
  func.func @transformer_block_kernel(%arg0: i32, %arg1: memref<16x32xf32, #tpu.memory_space<vmem>>, %arg2: memref<2x8xf32, #tpu.memory_space<vmem>>, %arg3: memref<1x32xf32, #tpu.memory_space<vmem>>, %arg4: memref<1x32xf32, #tpu.memory_space<vmem>>, %arg5: memref<2x32x16xbf16, #tpu.memory_space<vmem>>, %arg6: memref<2x1x16xf32, #tpu.memory_space<vmem>>, %arg7: memref<2x32x16xbf16, #tpu.memory_space<vmem>>, %arg8: memref<2x1x16xf32, #tpu.memory_space<vmem>>, %arg9: memref<2x32x16xbf16, #tpu.memory_space<vmem>>, %arg10: memref<2x1x16xf32, #tpu.memory_space<vmem>>, %arg11: memref<32x32xbf16, #tpu.memory_space<vmem>>, %arg12: memref<1x32xf32, #tpu.memory_space<vmem>>, %arg13: memref<1x32xf32, #tpu.memory_space<vmem>>, %arg14: memref<1x32xf32, #tpu.memory_space<vmem>>, %arg15: memref<32x64xbf16, #tpu.memory_space<vmem>>, %arg16: memref<1x64xf32, #tpu.memory_space<vmem>>, %arg17: memref<64x32xbf16, #tpu.memory_space<vmem>>, %arg18: memref<1x32xf32, #tpu.memory_space<vmem>>, %arg19: memref<16x32xf32, #tpu.memory_space<vmem>>, %arg20: memref<16x32xf32, #tpu.memory_space<vmem>>) attributes {dimension_semantics = [#tpu.dimension_semantics<arbitrary>], iteration_bounds = array<i64: 1>, scalar_prefetch = 0 : i64, scratch_operands = 1 : i64, tpu.core_type = #tpu.core_type<tc>, window_params = [{transform_indices = @transform_0, window_bounds = array<i64: 16, 32>}, {transform_indices = @transform_1, window_bounds = array<i64: 2, 8>}, {pipeline_mode = #tpu.pipeline_mode<synchronous>, transform_indices = @transform_2, window_bounds = array<i64: 1, 32>}, {pipeline_mode = #tpu.pipeline_mode<synchronous>, transform_indices = @transform_3, window_bounds = array<i64: 1, 32>}, {pipeline_mode = #tpu.pipeline_mode<synchronous>, transform_indices = @transform_4, window_bounds = array<i64: 2, 32, 16>}, {pipeline_mode = #tpu.pipeline_mode<synchronous>, transform_indices = @transform_5, window_bounds = array<i64: 2, 1, 16>}, {pipeline_mode = #tpu.pipeline_mode<synchronous>, transform_indices = @transform_6, window_bounds = array<i64: 2, 32, 16>}, {pipeline_mode = #tpu.pipeline_mode<synchronous>, transform_indices = @transform_7, window_bounds = array<i64: 2, 1, 16>}, {pipeline_mode = #tpu.pipeline_mode<synchronous>, transform_indices = @transform_8, window_bounds = array<i64: 2, 32, 16>}, {pipeline_mode = #tpu.pipeline_mode<synchronous>, transform_indices = @transform_9, window_bounds = array<i64: 2, 1, 16>}, {pipeline_mode = #tpu.pipeline_mode<synchronous>, transform_indices = @transform_10, window_bounds = array<i64: 32, 32>}, {pipeline_mode = #tpu.pipeline_mode<synchronous>, transform_indices = @transform_11, window_bounds = array<i64: 1, 32>}, {pipeline_mode = #tpu.pipeline_mode<synchronous>, transform_indices = @transform_12, window_bounds = array<i64: 1, 32>}, {pipeline_mode = #tpu.pipeline_mode<synchronous>, transform_indices = @transform_13, window_bounds = array<i64: 1, 32>}, {pipeline_mode = #tpu.pipeline_mode<synchronous>, transform_indices = @transform_14, window_bounds = array<i64: 32, 64>}, {pipeline_mode = #tpu.pipeline_mode<synchronous>, transform_indices = @transform_15, window_bounds = array<i64: 1, 64>}, {pipeline_mode = #tpu.pipeline_mode<synchronous>, transform_indices = @transform_16, window_bounds = array<i64: 64, 32>}, {pipeline_mode = #tpu.pipeline_mode<synchronous>, transform_indices = @transform_17, window_bounds = array<i64: 1, 32>}, {transform_indices = @transform_18, window_bounds = array<i64: 16, 32>}]} {
    %c0 = arith.constant 0 : index
    %c0_0 = arith.constant 0 : index
    %0 = vector.load %arg1[%c0, %c0_0] : memref<16x32xf32, #tpu.memory_space<vmem>>, vector<16x32xf32>
    %c0_1 = arith.constant 0 : index
    %c0_2 = arith.constant 0 : index
    %1 = vector.load %arg2[%c0_1, %c0_2] : memref<2x8xf32, #tpu.memory_space<vmem>>, vector<2x8xf32>
    %cst = arith.constant 1.000000e+00 : f32
    %2 = vector.broadcast %cst : f32 to vector<2x8xf32>
    %3 = arith.subf %2, %1 : vector<2x8xf32>
    %cst_3 = arith.constant 1.000000e+06 : f32
    %4 = vector.broadcast %cst_3 : f32 to vector<2x8xf32>
    %5 = arith.mulf %4, %3 : vector<2x8xf32>
    %c0_4 = arith.constant 0 : index
    %c0_5 = arith.constant 0 : index
    %6 = vector.load %arg3[%c0_4, %c0_5] : memref<1x32xf32, #tpu.memory_space<vmem>>, vector<1x32xf32>
    %c0_6 = arith.constant 0 : index
    %c0_7 = arith.constant 0 : index
    %7 = vector.load %arg4[%c0_6, %c0_7] : memref<1x32xf32, #tpu.memory_space<vmem>>, vector<1x32xf32>
    %cst_8 = arith.constant dense<0.000000e+00> : vector<16xf32>
    %8 = vector.multi_reduction <add>, %0, %cst_8 [1] : vector<16x32xf32> to vector<16xf32>
    %9 = vector.shape_cast %8 : vector<16xf32> to vector<16x1xf32>
    %cst_9 = arith.constant 3.200000e+01 : f32
    %10 = vector.broadcast %cst_9 : f32 to vector<16x1xf32>
    %11 = arith.divf %9, %10 : vector<16x1xf32>
    %12 = vector.broadcast %11 : vector<16x1xf32> to vector<16x32xf32>
    %13 = arith.subf %0, %12 : vector<16x32xf32>
    %14 = arith.mulf %13, %13 : vector<16x32xf32>
    %cst_10 = arith.constant dense<0.000000e+00> : vector<16xf32>
    %15 = vector.multi_reduction <add>, %14, %cst_10 [1] : vector<16x32xf32> to vector<16xf32>
    %16 = vector.shape_cast %15 : vector<16xf32> to vector<16x1xf32>
    %cst_11 = arith.constant 3.200000e+01 : f32
    %17 = vector.broadcast %cst_11 : f32 to vector<16x1xf32>
    %18 = arith.divf %16, %17 : vector<16x1xf32>
    %cst_12 = arith.constant 9.99999974E-6 : f32
    %19 = vector.broadcast %cst_12 : f32 to vector<16x1xf32>
    %20 = arith.addf %18, %19 : vector<16x1xf32>
    %21 = math.rsqrt %20 : vector<16x1xf32>
    %22 = vector.broadcast %21 : vector<16x1xf32> to vector<16x32xf32>
    %23 = arith.mulf %13, %22 : vector<16x32xf32>
    %24 = vector.broadcast %6 : vector<1x32xf32> to vector<16x32xf32>
    %25 = arith.mulf %23, %24 : vector<16x32xf32>
    %26 = vector.broadcast %7 : vector<1x32xf32> to vector<16x32xf32>
    %27 = arith.addf %25, %26 : vector<16x32xf32>
    %28 = arith.truncf %27 : vector<16x32xf32> to vector<16x32xbf16>
    %c0_13 = arith.constant 0 : index
    %c0_14 = arith.constant 0 : index
    %c0_15 = arith.constant 0 : index
    %29 = vector.load %arg5[%c0_13, %c0_14, %c0_15] : memref<2x32x16xbf16, #tpu.memory_space<vmem>>, vector<1x32x16xbf16>
    %30 = vector.shape_cast %29 : vector<1x32x16xbf16> to vector<32x16xbf16>
    %cst_16 = arith.constant dense<0.000000e+00> : vector<16x16xf32>
    %31 = tpu.matmul %28, %30, %cst_16 {dimension_numbers = #tpu.dot_dimension_numbers<[1], [0], [0], [1], [0, 0, 1, 1], [], []>} : vector<16x32xbf16>, vector<32x16xbf16>, vector<16x16xf32> -> vector<16x16xf32>
    %c0_17 = arith.constant 0 : index
    %c0_18 = arith.constant 0 : index
    %c0_19 = arith.constant 0 : index
    %32 = vector.load %arg6[%c0_17, %c0_18, %c0_19] : memref<2x1x16xf32, #tpu.memory_space<vmem>>, vector<1x1x16xf32>
    %33 = vector.shape_cast %32 : vector<1x1x16xf32> to vector<1x16xf32>
    %34 = vector.broadcast %33 : vector<1x16xf32> to vector<16x16xf32>
    %35 = arith.addf %31, %34 : vector<16x16xf32>
    %36 = arith.truncf %35 : vector<16x16xf32> to vector<16x16xbf16>
    %c0_20 = arith.constant 0 : index
    %c0_21 = arith.constant 0 : index
    %c0_22 = arith.constant 0 : index
    %37 = vector.load %arg7[%c0_20, %c0_21, %c0_22] : memref<2x32x16xbf16, #tpu.memory_space<vmem>>, vector<1x32x16xbf16>
    %38 = vector.shape_cast %37 : vector<1x32x16xbf16> to vector<32x16xbf16>
    %cst_23 = arith.constant dense<0.000000e+00> : vector<16x16xf32>
    %39 = tpu.matmul %28, %38, %cst_23 {dimension_numbers = #tpu.dot_dimension_numbers<[1], [0], [0], [1], [0, 0, 1, 1], [], []>} : vector<16x32xbf16>, vector<32x16xbf16>, vector<16x16xf32> -> vector<16x16xf32>
    %c0_24 = arith.constant 0 : index
    %c0_25 = arith.constant 0 : index
    %c0_26 = arith.constant 0 : index
    %40 = vector.load %arg8[%c0_24, %c0_25, %c0_26] : memref<2x1x16xf32, #tpu.memory_space<vmem>>, vector<1x1x16xf32>
    %41 = vector.shape_cast %40 : vector<1x1x16xf32> to vector<1x16xf32>
    %42 = vector.broadcast %41 : vector<1x16xf32> to vector<16x16xf32>
    %43 = arith.addf %39, %42 : vector<16x16xf32>
    %44 = arith.truncf %43 : vector<16x16xf32> to vector<16x16xbf16>
    %c0_27 = arith.constant 0 : index
    %c0_28 = arith.constant 0 : index
    %c0_29 = arith.constant 0 : index
    %45 = vector.load %arg9[%c0_27, %c0_28, %c0_29] : memref<2x32x16xbf16, #tpu.memory_space<vmem>>, vector<1x32x16xbf16>
    %46 = vector.shape_cast %45 : vector<1x32x16xbf16> to vector<32x16xbf16>
    %cst_30 = arith.constant dense<0.000000e+00> : vector<16x16xf32>
    %47 = tpu.matmul %28, %46, %cst_30 {dimension_numbers = #tpu.dot_dimension_numbers<[1], [0], [0], [1], [0, 0, 1, 1], [], []>} : vector<16x32xbf16>, vector<32x16xbf16>, vector<16x16xf32> -> vector<16x16xf32>
    %c0_31 = arith.constant 0 : index
    %c0_32 = arith.constant 0 : index
    %c0_33 = arith.constant 0 : index
    %48 = vector.load %arg10[%c0_31, %c0_32, %c0_33] : memref<2x1x16xf32, #tpu.memory_space<vmem>>, vector<1x1x16xf32>
    %49 = vector.shape_cast %48 : vector<1x1x16xf32> to vector<1x16xf32>
    %50 = vector.broadcast %49 : vector<1x16xf32> to vector<16x16xf32>
    %51 = arith.addf %47, %50 : vector<16x16xf32>
    %52 = arith.truncf %51 : vector<16x16xf32> to vector<16x16xbf16>
    %53 = vector.extract_strided_slice %36 {offsets = [0, 0], sizes = [8, 16], strides = [1, 1]} : vector<16x16xbf16> to vector<8x16xbf16>
    %54 = vector.extract_strided_slice %44 {offsets = [0, 0], sizes = [8, 16], strides = [1, 1]} : vector<16x16xbf16> to vector<8x16xbf16>
    %55 = vector.extract_strided_slice %52 {offsets = [0, 0], sizes = [8, 16], strides = [1, 1]} : vector<16x16xbf16> to vector<8x16xbf16>
    %cst_34 = arith.constant dense<0.000000e+00> : vector<8x8xf32>
    %56 = tpu.matmul %53, %54, %cst_34 {dimension_numbers = #tpu.dot_dimension_numbers<[1], [1], [0], [0], [0, 0, 1, 0], [], []>} : vector<8x16xbf16>, vector<8x16xbf16>, vector<8x8xf32> -> vector<8x8xf32>
    %cst_35 = arith.constant 2.500000e-01 : f32
    %57 = vector.broadcast %cst_35 : f32 to vector<8x8xf32>
    %58 = arith.mulf %56, %57 : vector<8x8xf32>
    %59 = vector.extract_strided_slice %5 {offsets = [0, 0], sizes = [1, 8], strides = [1, 1]} : vector<2x8xf32> to vector<1x8xf32>
    %60 = vector.broadcast %59 : vector<1x8xf32> to vector<8x8xf32>
    %61 = arith.subf %58, %60 : vector<8x8xf32>
    %cst_36 = arith.constant dense<0xFF800000> : vector<8xf32>
    %62 = vector.multi_reduction <maximumf>, %61, %cst_36 [1] : vector<8x8xf32> to vector<8xf32>
    %63 = vector.shape_cast %62 : vector<8xf32> to vector<8x1xf32>
    %64 = vector.broadcast %63 : vector<8x1xf32> to vector<8x8xf32>
    %65 = arith.subf %61, %64 : vector<8x8xf32>
    %66 = math.exp %65 : vector<8x8xf32>
    %cst_37 = arith.constant dense<0.000000e+00> : vector<8xf32>
    %67 = vector.multi_reduction <add>, %66, %cst_37 [1] : vector<8x8xf32> to vector<8xf32>
    %68 = vector.shape_cast %67 : vector<8xf32> to vector<8x1xf32>
    %69 = tpu.reciprocal %68 {approx = true} : vector<8x1xf32> -> vector<8x1xf32>
    %70 = vector.broadcast %69 : vector<8x1xf32> to vector<8x8xf32>
    %71 = arith.mulf %66, %70 : vector<8x8xf32>
    %72 = arith.truncf %71 : vector<8x8xf32> to vector<8x8xbf16>
    %cst_38 = arith.constant dense<0.000000e+00> : vector<8x16xf32>
    %73 = tpu.matmul %72, %55, %cst_38 {dimension_numbers = #tpu.dot_dimension_numbers<[1], [0], [0], [1], [0, 0, 1, 1], [], []>} : vector<8x8xbf16>, vector<8x16xbf16>, vector<8x16xf32> -> vector<8x16xf32>
    %c0_39 = arith.constant 0 : index
    %c0_40 = arith.constant 0 : index
    %74 = vector.load %arg20[%c0_39, %c0_40] : memref<16x32xf32, #tpu.memory_space<vmem>>, vector<8x16xf32>
    tpu.vector_store %arg20[%c0_39, %c0_40], %73 {strides = array<i32>} : memref<16x32xf32, #tpu.memory_space<vmem>>, vector<8x16xf32>,
    %75 = vector.extract_strided_slice %36 {offsets = [8, 0], sizes = [8, 16], strides = [1, 1]} : vector<16x16xbf16> to vector<8x16xbf16>
    %76 = vector.extract_strided_slice %44 {offsets = [8, 0], sizes = [8, 16], strides = [1, 1]} : vector<16x16xbf16> to vector<8x16xbf16>
    %77 = vector.extract_strided_slice %52 {offsets = [8, 0], sizes = [8, 16], strides = [1, 1]} : vector<16x16xbf16> to vector<8x16xbf16>
    %cst_41 = arith.constant dense<0.000000e+00> : vector<8x8xf32>
    %78 = tpu.matmul %75, %76, %cst_41 {dimension_numbers = #tpu.dot_dimension_numbers<[1], [1], [0], [0], [0, 0, 1, 0], [], []>} : vector<8x16xbf16>, vector<8x16xbf16>, vector<8x8xf32> -> vector<8x8xf32>
    %cst_42 = arith.constant 2.500000e-01 : f32
    %79 = vector.broadcast %cst_42 : f32 to vector<8x8xf32>
    %80 = arith.mulf %78, %79 : vector<8x8xf32>
    %81 = vector.extract_strided_slice %5 {offsets = [1, 0], sizes = [1, 8], strides = [1, 1]} : vector<2x8xf32> to vector<1x8xf32>
    %82 = vector.broadcast %81 : vector<1x8xf32> to vector<8x8xf32>
    %83 = arith.subf %80, %82 : vector<8x8xf32>
    %cst_43 = arith.constant dense<0xFF800000> : vector<8xf32>
    %84 = vector.multi_reduction <maximumf>, %83, %cst_43 [1] : vector<8x8xf32> to vector<8xf32>
    %85 = vector.shape_cast %84 : vector<8xf32> to vector<8x1xf32>
    %86 = vector.broadcast %85 : vector<8x1xf32> to vector<8x8xf32>
    %87 = arith.subf %83, %86 : vector<8x8xf32>
    %88 = math.exp %87 : vector<8x8xf32>
    %cst_44 = arith.constant dense<0.000000e+00> : vector<8xf32>
    %89 = vector.multi_reduction <add>, %88, %cst_44 [1] : vector<8x8xf32> to vector<8xf32>
    %90 = vector.shape_cast %89 : vector<8xf32> to vector<8x1xf32>
    %91 = tpu.reciprocal %90 {approx = true} : vector<8x1xf32> -> vector<8x1xf32>
    %92 = vector.broadcast %91 : vector<8x1xf32> to vector<8x8xf32>
    %93 = arith.mulf %88, %92 : vector<8x8xf32>
    %94 = arith.truncf %93 : vector<8x8xf32> to vector<8x8xbf16>
    %cst_45 = arith.constant dense<0.000000e+00> : vector<8x16xf32>
    %95 = tpu.matmul %94, %77, %cst_45 {dimension_numbers = #tpu.dot_dimension_numbers<[1], [0], [0], [1], [0, 0, 1, 1], [], []>} : vector<8x8xbf16>, vector<8x16xbf16>, vector<8x16xf32> -> vector<8x16xf32>
    %c8 = arith.constant 8 : index
    %c0_46 = arith.constant 0 : index
    %96 = vector.load %arg20[%c8, %c0_46] : memref<16x32xf32, #tpu.memory_space<vmem>>, vector<8x16xf32>
    tpu.vector_store %arg20[%c8, %c0_46], %95 {strides = array<i32>} : memref<16x32xf32, #tpu.memory_space<vmem>>, vector<8x16xf32>,
    %c1 = arith.constant 1 : index
    %c0_47 = arith.constant 0 : index
    %c0_48 = arith.constant 0 : index
    %97 = vector.load %arg5[%c1, %c0_47, %c0_48] : memref<2x32x16xbf16, #tpu.memory_space<vmem>>, vector<1x32x16xbf16>
    %98 = vector.shape_cast %97 : vector<1x32x16xbf16> to vector<32x16xbf16>
    %cst_49 = arith.constant dense<0.000000e+00> : vector<16x16xf32>
    %99 = tpu.matmul %28, %98, %cst_49 {dimension_numbers = #tpu.dot_dimension_numbers<[1], [0], [0], [1], [0, 0, 1, 1], [], []>} : vector<16x32xbf16>, vector<32x16xbf16>, vector<16x16xf32> -> vector<16x16xf32>
    %c1_50 = arith.constant 1 : index
    %c0_51 = arith.constant 0 : index
    %c0_52 = arith.constant 0 : index
    %100 = vector.load %arg6[%c1_50, %c0_51, %c0_52] : memref<2x1x16xf32, #tpu.memory_space<vmem>>, vector<1x1x16xf32>
    %101 = vector.shape_cast %100 : vector<1x1x16xf32> to vector<1x16xf32>
    %102 = vector.broadcast %101 : vector<1x16xf32> to vector<16x16xf32>
    %103 = arith.addf %99, %102 : vector<16x16xf32>
    %104 = arith.truncf %103 : vector<16x16xf32> to vector<16x16xbf16>
    %c1_53 = arith.constant 1 : index
    %c0_54 = arith.constant 0 : index
    %c0_55 = arith.constant 0 : index
    %105 = vector.load %arg7[%c1_53, %c0_54, %c0_55] : memref<2x32x16xbf16, #tpu.memory_space<vmem>>, vector<1x32x16xbf16>
    %106 = vector.shape_cast %105 : vector<1x32x16xbf16> to vector<32x16xbf16>
    %cst_56 = arith.constant dense<0.000000e+00> : vector<16x16xf32>
    %107 = tpu.matmul %28, %106, %cst_56 {dimension_numbers = #tpu.dot_dimension_numbers<[1], [0], [0], [1], [0, 0, 1, 1], [], []>} : vector<16x32xbf16>, vector<32x16xbf16>, vector<16x16xf32> -> vector<16x16xf32>
    %c1_57 = arith.constant 1 : index
    %c0_58 = arith.constant 0 : index
    %c0_59 = arith.constant 0 : index
    %108 = vector.load %arg8[%c1_57, %c0_58, %c0_59] : memref<2x1x16xf32, #tpu.memory_space<vmem>>, vector<1x1x16xf32>
    %109 = vector.shape_cast %108 : vector<1x1x16xf32> to vector<1x16xf32>
    %110 = vector.broadcast %109 : vector<1x16xf32> to vector<16x16xf32>
    %111 = arith.addf %107, %110 : vector<16x16xf32>
    %112 = arith.truncf %111 : vector<16x16xf32> to vector<16x16xbf16>
    %c1_60 = arith.constant 1 : index
    %c0_61 = arith.constant 0 : index
    %c0_62 = arith.constant 0 : index
    %113 = vector.load %arg9[%c1_60, %c0_61, %c0_62] : memref<2x32x16xbf16, #tpu.memory_space<vmem>>, vector<1x32x16xbf16>
    %114 = vector.shape_cast %113 : vector<1x32x16xbf16> to vector<32x16xbf16>
    %cst_63 = arith.constant dense<0.000000e+00> : vector<16x16xf32>
    %115 = tpu.matmul %28, %114, %cst_63 {dimension_numbers = #tpu.dot_dimension_numbers<[1], [0], [0], [1], [0, 0, 1, 1], [], []>} : vector<16x32xbf16>, vector<32x16xbf16>, vector<16x16xf32> -> vector<16x16xf32>
    %c1_64 = arith.constant 1 : index
    %c0_65 = arith.constant 0 : index
    %c0_66 = arith.constant 0 : index
    %116 = vector.load %arg10[%c1_64, %c0_65, %c0_66] : memref<2x1x16xf32, #tpu.memory_space<vmem>>, vector<1x1x16xf32>
    %117 = vector.shape_cast %116 : vector<1x1x16xf32> to vector<1x16xf32>
    %118 = vector.broadcast %117 : vector<1x16xf32> to vector<16x16xf32>
    %119 = arith.addf %115, %118 : vector<16x16xf32>
    %120 = arith.truncf %119 : vector<16x16xf32> to vector<16x16xbf16>
    %121 = vector.extract_strided_slice %104 {offsets = [0, 0], sizes = [8, 16], strides = [1, 1]} : vector<16x16xbf16> to vector<8x16xbf16>
    %122 = vector.extract_strided_slice %112 {offsets = [0, 0], sizes = [8, 16], strides = [1, 1]} : vector<16x16xbf16> to vector<8x16xbf16>
    %123 = vector.extract_strided_slice %120 {offsets = [0, 0], sizes = [8, 16], strides = [1, 1]} : vector<16x16xbf16> to vector<8x16xbf16>
    %cst_67 = arith.constant dense<0.000000e+00> : vector<8x8xf32>
    %124 = tpu.matmul %121, %122, %cst_67 {dimension_numbers = #tpu.dot_dimension_numbers<[1], [1], [0], [0], [0, 0, 1, 0], [], []>} : vector<8x16xbf16>, vector<8x16xbf16>, vector<8x8xf32> -> vector<8x8xf32>
    %cst_68 = arith.constant 2.500000e-01 : f32
    %125 = vector.broadcast %cst_68 : f32 to vector<8x8xf32>
    %126 = arith.mulf %124, %125 : vector<8x8xf32>
    %127 = vector.extract_strided_slice %5 {offsets = [0, 0], sizes = [1, 8], strides = [1, 1]} : vector<2x8xf32> to vector<1x8xf32>
    %128 = vector.broadcast %127 : vector<1x8xf32> to vector<8x8xf32>
    %129 = arith.subf %126, %128 : vector<8x8xf32>
    %cst_69 = arith.constant dense<0xFF800000> : vector<8xf32>
    %130 = vector.multi_reduction <maximumf>, %129, %cst_69 [1] : vector<8x8xf32> to vector<8xf32>
    %131 = vector.shape_cast %130 : vector<8xf32> to vector<8x1xf32>
    %132 = vector.broadcast %131 : vector<8x1xf32> to vector<8x8xf32>
    %133 = arith.subf %129, %132 : vector<8x8xf32>
    %134 = math.exp %133 : vector<8x8xf32>
    %cst_70 = arith.constant dense<0.000000e+00> : vector<8xf32>
    %135 = vector.multi_reduction <add>, %134, %cst_70 [1] : vector<8x8xf32> to vector<8xf32>
    %136 = vector.shape_cast %135 : vector<8xf32> to vector<8x1xf32>
    %137 = tpu.reciprocal %136 {approx = true} : vector<8x1xf32> -> vector<8x1xf32>
    %138 = vector.broadcast %137 : vector<8x1xf32> to vector<8x8xf32>
    %139 = arith.mulf %134, %138 : vector<8x8xf32>
    %140 = arith.truncf %139 : vector<8x8xf32> to vector<8x8xbf16>
    %cst_71 = arith.constant dense<0.000000e+00> : vector<8x16xf32>
    %141 = tpu.matmul %140, %123, %cst_71 {dimension_numbers = #tpu.dot_dimension_numbers<[1], [0], [0], [1], [0, 0, 1, 1], [], []>} : vector<8x8xbf16>, vector<8x16xbf16>, vector<8x16xf32> -> vector<8x16xf32>
    %c0_72 = arith.constant 0 : index
    %c16 = arith.constant 16 : index
    %142 = vector.load %arg20[%c0_72, %c16] : memref<16x32xf32, #tpu.memory_space<vmem>>, vector<8x16xf32>
    tpu.vector_store %arg20[%c0_72, %c16], %141 {strides = array<i32>} : memref<16x32xf32, #tpu.memory_space<vmem>>, vector<8x16xf32>,
    %143 = vector.extract_strided_slice %104 {offsets = [8, 0], sizes = [8, 16], strides = [1, 1]} : vector<16x16xbf16> to vector<8x16xbf16>
    %144 = vector.extract_strided_slice %112 {offsets = [8, 0], sizes = [8, 16], strides = [1, 1]} : vector<16x16xbf16> to vector<8x16xbf16>
    %145 = vector.extract_strided_slice %120 {offsets = [8, 0], sizes = [8, 16], strides = [1, 1]} : vector<16x16xbf16> to vector<8x16xbf16>
    %cst_73 = arith.constant dense<0.000000e+00> : vector<8x8xf32>
    %146 = tpu.matmul %143, %144, %cst_73 {dimension_numbers = #tpu.dot_dimension_numbers<[1], [1], [0], [0], [0, 0, 1, 0], [], []>} : vector<8x16xbf16>, vector<8x16xbf16>, vector<8x8xf32> -> vector<8x8xf32>
    %cst_74 = arith.constant 2.500000e-01 : f32
    %147 = vector.broadcast %cst_74 : f32 to vector<8x8xf32>
    %148 = arith.mulf %146, %147 : vector<8x8xf32>
    %149 = vector.extract_strided_slice %5 {offsets = [1, 0], sizes = [1, 8], strides = [1, 1]} : vector<2x8xf32> to vector<1x8xf32>
    %150 = vector.broadcast %149 : vector<1x8xf32> to vector<8x8xf32>
    %151 = arith.subf %148, %150 : vector<8x8xf32>
    %cst_75 = arith.constant dense<0xFF800000> : vector<8xf32>
    %152 = vector.multi_reduction <maximumf>, %151, %cst_75 [1] : vector<8x8xf32> to vector<8xf32>
    %153 = vector.shape_cast %152 : vector<8xf32> to vector<8x1xf32>
    %154 = vector.broadcast %153 : vector<8x1xf32> to vector<8x8xf32>
    %155 = arith.subf %151, %154 : vector<8x8xf32>
    %156 = math.exp %155 : vector<8x8xf32>
    %cst_76 = arith.constant dense<0.000000e+00> : vector<8xf32>
    %157 = vector.multi_reduction <add>, %156, %cst_76 [1] : vector<8x8xf32> to vector<8xf32>
    %158 = vector.shape_cast %157 : vector<8xf32> to vector<8x1xf32>
    %159 = tpu.reciprocal %158 {approx = true} : vector<8x1xf32> -> vector<8x1xf32>
    %160 = vector.broadcast %159 : vector<8x1xf32> to vector<8x8xf32>
    %161 = arith.mulf %156, %160 : vector<8x8xf32>
    %162 = arith.truncf %161 : vector<8x8xf32> to vector<8x8xbf16>
    %cst_77 = arith.constant dense<0.000000e+00> : vector<8x16xf32>
    %163 = tpu.matmul %162, %145, %cst_77 {dimension_numbers = #tpu.dot_dimension_numbers<[1], [0], [0], [1], [0, 0, 1, 1], [], []>} : vector<8x8xbf16>, vector<8x16xbf16>, vector<8x16xf32> -> vector<8x16xf32>
    %c8_78 = arith.constant 8 : index
    %c16_79 = arith.constant 16 : index
    %164 = vector.load %arg20[%c8_78, %c16_79] : memref<16x32xf32, #tpu.memory_space<vmem>>, vector<8x16xf32>
    tpu.vector_store %arg20[%c8_78, %c16_79], %163 {strides = array<i32>} : memref<16x32xf32, #tpu.memory_space<vmem>>, vector<8x16xf32>,
    %c0_80 = arith.constant 0 : index
    %c0_81 = arith.constant 0 : index
    %165 = vector.load %arg20[%c0_80, %c0_81] : memref<16x32xf32, #tpu.memory_space<vmem>>, vector<16x32xf32>
    %166 = arith.truncf %165 : vector<16x32xf32> to vector<16x32xbf16>
    %c0_82 = arith.constant 0 : index
    %c0_83 = arith.constant 0 : index
    %167 = vector.load %arg11[%c0_82, %c0_83] : memref<32x32xbf16, #tpu.memory_space<vmem>>, vector<32x32xbf16>
    %cst_84 = arith.constant dense<0.000000e+00> : vector<16x32xf32>
    %168 = tpu.matmul %166, %167, %cst_84 {dimension_numbers = #tpu.dot_dimension_numbers<[1], [0], [0], [1], [0, 0, 1, 1], [], []>} : vector<16x32xbf16>, vector<32x32xbf16>, vector<16x32xf32> -> vector<16x32xf32>
    %c0_85 = arith.constant 0 : index
    %c0_86 = arith.constant 0 : index
    %169 = vector.load %arg12[%c0_85, %c0_86] : memref<1x32xf32, #tpu.memory_space<vmem>>, vector<1x32xf32>
    %170 = vector.broadcast %169 : vector<1x32xf32> to vector<16x32xf32>
    %171 = arith.addf %168, %170 : vector<16x32xf32>
    %172 = arith.addf %171, %0 : vector<16x32xf32>
    %c0_87 = arith.constant 0 : index
    %c0_88 = arith.constant 0 : index
    %173 = vector.load %arg13[%c0_87, %c0_88] : memref<1x32xf32, #tpu.memory_space<vmem>>, vector<1x32xf32>
    %c0_89 = arith.constant 0 : index
    %c0_90 = arith.constant 0 : index
    %174 = vector.load %arg14[%c0_89, %c0_90] : memref<1x32xf32, #tpu.memory_space<vmem>>, vector<1x32xf32>
    %cst_91 = arith.constant dense<0.000000e+00> : vector<16xf32>
    %175 = vector.multi_reduction <add>, %172, %cst_91 [1] : vector<16x32xf32> to vector<16xf32>
    %176 = vector.shape_cast %175 : vector<16xf32> to vector<16x1xf32>
    %cst_92 = arith.constant 3.200000e+01 : f32
    %177 = vector.broadcast %cst_92 : f32 to vector<16x1xf32>
    %178 = arith.divf %176, %177 : vector<16x1xf32>
    %179 = vector.broadcast %178 : vector<16x1xf32> to vector<16x32xf32>
    %180 = arith.subf %172, %179 : vector<16x32xf32>
    %181 = arith.mulf %180, %180 : vector<16x32xf32>
    %cst_93 = arith.constant dense<0.000000e+00> : vector<16xf32>
    %182 = vector.multi_reduction <add>, %181, %cst_93 [1] : vector<16x32xf32> to vector<16xf32>
    %183 = vector.shape_cast %182 : vector<16xf32> to vector<16x1xf32>
    %cst_94 = arith.constant 3.200000e+01 : f32
    %184 = vector.broadcast %cst_94 : f32 to vector<16x1xf32>
    %185 = arith.divf %183, %184 : vector<16x1xf32>
    %cst_95 = arith.constant 9.99999974E-6 : f32
    %186 = vector.broadcast %cst_95 : f32 to vector<16x1xf32>
    %187 = arith.addf %185, %186 : vector<16x1xf32>
    %188 = math.rsqrt %187 : vector<16x1xf32>
    %189 = vector.broadcast %188 : vector<16x1xf32> to vector<16x32xf32>
    %190 = arith.mulf %180, %189 : vector<16x32xf32>
    %191 = vector.broadcast %173 : vector<1x32xf32> to vector<16x32xf32>
    %192 = arith.mulf %190, %191 : vector<16x32xf32>
    %193 = vector.broadcast %174 : vector<1x32xf32> to vector<16x32xf32>
    %194 = arith.addf %192, %193 : vector<16x32xf32>
    %195 = arith.truncf %194 : vector<16x32xf32> to vector<16x32xbf16>
    %c0_96 = arith.constant 0 : index
    %c0_97 = arith.constant 0 : index
    %196 = vector.load %arg15[%c0_96, %c0_97] : memref<32x64xbf16, #tpu.memory_space<vmem>>, vector<32x64xbf16>
    %cst_98 = arith.constant dense<0.000000e+00> : vector<16x64xf32>
    %197 = tpu.matmul %195, %196, %cst_98 {dimension_numbers = #tpu.dot_dimension_numbers<[1], [0], [0], [1], [0, 0, 1, 1], [], []>} : vector<16x32xbf16>, vector<32x64xbf16>, vector<16x64xf32> -> vector<16x64xf32>
    %c0_99 = arith.constant 0 : index
    %c0_100 = arith.constant 0 : index
    %198 = vector.load %arg16[%c0_99, %c0_100] : memref<1x64xf32, #tpu.memory_space<vmem>>, vector<1x64xf32>
    %199 = vector.broadcast %198 : vector<1x64xf32> to vector<16x64xf32>
    %200 = arith.addf %197, %199 : vector<16x64xf32>
    %201 = arith.mulf %200, %200 : vector<16x64xf32>
    %202 = arith.mulf %200, %201 : vector<16x64xf32>
    %cst_101 = arith.constant 4.471500e-02 : f32
    %203 = vector.broadcast %cst_101 : f32 to vector<16x64xf32>
    %204 = arith.mulf %203, %202 : vector<16x64xf32>
    %205 = arith.addf %200, %204 : vector<16x64xf32>
    %cst_102 = arith.constant 0.797884583 : f32
    %206 = vector.broadcast %cst_102 : f32 to vector<16x64xf32>
    %207 = arith.mulf %206, %205 : vector<16x64xf32>
    %208 = math.tanh %207 : vector<16x64xf32>
    %cst_103 = arith.constant 1.000000e+00 : f32
    %209 = vector.broadcast %cst_103 : f32 to vector<16x64xf32>
    %210 = arith.addf %209, %208 : vector<16x64xf32>
    %cst_104 = arith.constant 5.000000e-01 : f32
    %211 = vector.broadcast %cst_104 : f32 to vector<16x64xf32>
    %212 = arith.mulf %211, %210 : vector<16x64xf32>
    %213 = arith.mulf %200, %212 : vector<16x64xf32>
    %214 = arith.truncf %213 : vector<16x64xf32> to vector<16x64xbf16>
    %c0_105 = arith.constant 0 : index
    %c0_106 = arith.constant 0 : index
    %215 = vector.load %arg17[%c0_105, %c0_106] : memref<64x32xbf16, #tpu.memory_space<vmem>>, vector<64x32xbf16>
    %cst_107 = arith.constant dense<0.000000e+00> : vector<16x32xf32>
    %216 = tpu.matmul %214, %215, %cst_107 {dimension_numbers = #tpu.dot_dimension_numbers<[1], [0], [0], [1], [0, 0, 1, 1], [], []>} : vector<16x64xbf16>, vector<64x32xbf16>, vector<16x32xf32> -> vector<16x32xf32>
    %c0_108 = arith.constant 0 : index
    %c0_109 = arith.constant 0 : index
    %217 = vector.load %arg18[%c0_108, %c0_109] : memref<1x32xf32, #tpu.memory_space<vmem>>, vector<1x32xf32>
    %218 = vector.broadcast %217 : vector<1x32xf32> to vector<16x32xf32>
    %219 = arith.addf %216, %218 : vector<16x32xf32>
    %220 = arith.addf %219, %172 : vector<16x32xf32>
    %c0_110 = arith.constant 0 : index
    %c0_111 = arith.constant 0 : index
    %221 = vector.load %arg19[%c0_110, %c0_111] : memref<16x32xf32, #tpu.memory_space<vmem>>, vector<16x32xf32>
    tpu.vector_store %arg19[%c0_110, %c0_111], %220 {strides = array<i32>} : memref<16x32xf32, #tpu.memory_space<vmem>>, vector<16x32xf32>,
    return
  }
  func.func @transform_0(%arg0: i32) -> (i32, i32) {
    %c0_i32 = arith.constant 0 : i32
    %c0_i32_0 = arith.constant 0 : i32
    return %arg0, %c0_i32 : i32, i32
  }
  func.func @transform_1(%arg0: i32) -> (i32, i32) {
    %c0_i32 = arith.constant 0 : i32
    %c0_i32_0 = arith.constant 0 : i32
    return %arg0, %c0_i32 : i32, i32
  }
  func.func @transform_2(%arg0: i32) -> (i32, i32) {
    %c0_i32 = arith.constant 0 : i32
    %c0_i32_0 = arith.constant 0 : i32
    %c0_i32_1 = arith.constant 0 : i32
    return %c0_i32, %c0_i32_0 : i32, i32
  }
  func.func @transform_3(%arg0: i32) -> (i32, i32) {
    %c0_i32 = arith.constant 0 : i32
    %c0_i32_0 = arith.constant 0 : i32
    %c0_i32_1 = arith.constant 0 : i32
    return %c0_i32, %c0_i32_0 : i32, i32
  }
  func.func @transform_4(%arg0: i32) -> (i32, i32, i32) {
    %c0_i32 = arith.constant 0 : i32
    %c0_i32_0 = arith.constant 0 : i32
    %c0_i32_1 = arith.constant 0 : i32
    %c0_i32_2 = arith.constant 0 : i32
    return %c0_i32, %c0_i32_0, %c0_i32_1 : i32, i32, i32
  }
  func.func @transform_5(%arg0: i32) -> (i32, i32, i32) {
    %c0_i32 = arith.constant 0 : i32
    %c0_i32_0 = arith.constant 0 : i32
    %c0_i32_1 = arith.constant 0 : i32
    %c0_i32_2 = arith.constant 0 : i32
    return %c0_i32, %c0_i32_0, %c0_i32_1 : i32, i32, i32
  }
  func.func @transform_6(%arg0: i32) -> (i32, i32, i32) {
    %c0_i32 = arith.constant 0 : i32
    %c0_i32_0 = arith.constant 0 : i32
    %c0_i32_1 = arith.constant 0 : i32
    %c0_i32_2 = arith.constant 0 : i32
    return %c0_i32, %c0_i32_0, %c0_i32_1 : i32, i32, i32
  }
  func.func @transform_7(%arg0: i32) -> (i32, i32, i32) {
    %c0_i32 = arith.constant 0 : i32
    %c0_i32_0 = arith.constant 0 : i32
    %c0_i32_1 = arith.constant 0 : i32
    %c0_i32_2 = arith.constant 0 : i32
    return %c0_i32, %c0_i32_0, %c0_i32_1 : i32, i32, i32
  }
  func.func @transform_8(%arg0: i32) -> (i32, i32, i32) {
    %c0_i32 = arith.constant 0 : i32
    %c0_i32_0 = arith.constant 0 : i32
    %c0_i32_1 = arith.constant 0 : i32
    %c0_i32_2 = arith.constant 0 : i32
    return %c0_i32, %c0_i32_0, %c0_i32_1 : i32, i32, i32
  }
  func.func @transform_9(%arg0: i32) -> (i32, i32, i32) {
    %c0_i32 = arith.constant 0 : i32
    %c0_i32_0 = arith.constant 0 : i32
    %c0_i32_1 = arith.constant 0 : i32
    %c0_i32_2 = arith.constant 0 : i32
    return %c0_i32, %c0_i32_0, %c0_i32_1 : i32, i32, i32
  }
  func.func @transform_10(%arg0: i32) -> (i32, i32) {
    %c0_i32 = arith.constant 0 : i32
    %c0_i32_0 = arith.constant 0 : i32
    %c0_i32_1 = arith.constant 0 : i32
    return %c0_i32, %c0_i32_0 : i32, i32
  }
  func.func @transform_11(%arg0: i32) -> (i32, i32) {
    %c0_i32 = arith.constant 0 : i32
    %c0_i32_0 = arith.constant 0 : i32
    %c0_i32_1 = arith.constant 0 : i32
    return %c0_i32, %c0_i32_0 : i32, i32
  }
  func.func @transform_12(%arg0: i32) -> (i32, i32) {
    %c0_i32 = arith.constant 0 : i32
    %c0_i32_0 = arith.constant 0 : i32
    %c0_i32_1 = arith.constant 0 : i32
    return %c0_i32, %c0_i32_0 : i32, i32
  }
  func.func @transform_13(%arg0: i32) -> (i32, i32) {
    %c0_i32 = arith.constant 0 : i32
    %c0_i32_0 = arith.constant 0 : i32
    %c0_i32_1 = arith.constant 0 : i32
    return %c0_i32, %c0_i32_0 : i32, i32
  }
  func.func @transform_14(%arg0: i32) -> (i32, i32) {
    %c0_i32 = arith.constant 0 : i32
    %c0_i32_0 = arith.constant 0 : i32
    %c0_i32_1 = arith.constant 0 : i32
    return %c0_i32, %c0_i32_0 : i32, i32
  }
  func.func @transform_15(%arg0: i32) -> (i32, i32) {
    %c0_i32 = arith.constant 0 : i32
    %c0_i32_0 = arith.constant 0 : i32
    %c0_i32_1 = arith.constant 0 : i32
    return %c0_i32, %c0_i32_0 : i32, i32
  }
  func.func @transform_16(%arg0: i32) -> (i32, i32) {
    %c0_i32 = arith.constant 0 : i32
    %c0_i32_0 = arith.constant 0 : i32
    %c0_i32_1 = arith.constant 0 : i32
    return %c0_i32, %c0_i32_0 : i32, i32
  }
  func.func @transform_17(%arg0: i32) -> (i32, i32) {
    %c0_i32 = arith.constant 0 : i32
    %c0_i32_0 = arith.constant 0 : i32
    %c0_i32_1 = arith.constant 0 : i32
    return %c0_i32, %c0_i32_0 : i32, i32
  }
  func.func @transform_18(%arg0: i32) -> (i32, i32) {
    %c0_i32 = arith.constant 0 : i32
    %c0_i32_0 = arith.constant 0 : i32
    return %arg0, %c0_i32 : i32, i32
  }
}

</mosaic_0001>

<llo_original>
// kernel: transformer_forward.1
$region0: #{transformer_forward.1}
  #allocation0 [shape = 'u32[]', space=smem, size = 0x4, offset = 0x4, fixed_abs, tag = 'smem constant byte address 0x4 - core index']
  #allocation1 [shape = 'u32[72,128]{1,0:T(1,128)}', space=vmem, size = 0x9000, scoped, tag = 'internal scratch']
  #allocation2 [shape = 'f32[16,32]{1,0:T(8,128)}', space=vmem, size = 0x2000, scoped, tag = 'scratch operand']
  %s0 = inlined_call_operand.hbm [shape: f32[16,32], index: 0, kind: input, shape index: {}]
  %s1 = inlined_call_operand.vmem [shape: f32[2,8], index: 1, kind: input, shape index: {}]
  %s2 = inlined_call_operand.vmem [shape: f32[1,32], index: 2, kind: input, shape index: {}, may-alias: {2,12}]
  %s3 = inlined_call_operand.vmem [shape: f32[1,32], index: 3, kind: input, shape index: {}, may-alias: {3,13}]
  %s4 = inlined_call_operand.hbm [shape: bf16[2,32,16], index: 4, kind: input, shape index: {}]
  %s5 = inlined_call_operand.vmem [shape: f32[2,1,16], index: 5, kind: input, shape index: {}]
  %s6 = inlined_call_operand.hbm [shape: bf16[2,32,16], index: 6, kind: input, shape index: {}]
  %s7 = inlined_call_operand.vmem [shape: f32[2,1,16], index: 7, kind: input, shape index: {}]
  %s8 = inlined_call_operand.hbm [shape: bf16[2,32,16], index: 8, kind: input, shape index: {}]
  %s9 = inlined_call_operand.vmem [shape: f32[2,1,16], index: 9, kind: input, shape index: {}]
  %s10 = inlined_call_operand.hbm [shape: bf16[32,32], index: 10, kind: input, shape index: {}]
  %s11 = inlined_call_operand.vmem [shape: f32[1,32], index: 11, kind: input, shape index: {}]
  %s12 = inlined_call_operand.vmem [shape: f32[1,32], index: 12, kind: input, shape index: {}, may-alias: {2,12}]
  %s13 = inlined_call_operand.vmem [shape: f32[1,32], index: 13, kind: input, shape index: {}, may-alias: {3,13}]
  %s14 = inlined_call_operand.hbm [shape: bf16[32,64], index: 14, kind: input, shape index: {}]
  %s15 = inlined_call_operand.vmem [shape: f32[1,64], index: 15, kind: input, shape index: {}]
  %s16 = inlined_call_operand.hbm [shape: bf16[64,32], index: 16, kind: input, shape index: {}]
  %s17 = inlined_call_operand.vmem [shape: f32[1,32], index: 17, kind: input, shape index: {}]
  %s18 = inlined_call_operand.hbm [shape: f32[16,32], index: 18, kind: output, shape index: {}]
  %s19 = sld [smem:[#allocation0]]
  $region110: #{transformer_forward.1} parent=0
    _
  %s21 = ssub.s32 1, %s19
  %s22 = scalar_select 0, %s21, %s19
  $region1: #{transformer_forward.1} parent=0
    #allocation3 [shape = 'u8[8192]{0}', space=vmem, size = 0x2000, scoped, tag = 'input window, operand 0, single buffered']
    #allocation4 [shape = 's32[1]{0}', space=sflag, size = 0x4, scoped, tag = 'scoped memory for transformer_forward.1']
    #allocation5 [shape = 's32[1]{0}', space=sflag, size = 0x4, scoped, tag = 'scoped memory for transformer_forward.1']
    #allocation6 [shape = 'u8[16384]{0}', space=vmem, size = 0x4000, scoped, tag = 'input window, operand 4, single buffered']
    #allocation7 [shape = 's32[1]{0}', space=sflag, size = 0x4, scoped, tag = 'scoped memory for transformer_forward.1']
    #allocation8 [shape = 'u8[16384]{0}', space=vmem, size = 0x4000, scoped, tag = 'input window, operand 6, single buffered']
    #allocation9 [shape = 'u8[16384]{0}', space=vmem, size = 0x4000, scoped, tag = 'input window, operand 8, single buffered']
    #allocation10 [shape = 's32[1]{0}', space=sflag, size = 0x4, scoped, tag = 'scoped memory for transformer_forward.1']
    #allocation11 [shape = 'u8[8192]{0}', space=vmem, size = 0x2000, scoped, tag = 'input window, operand 10, single buffered']
    #allocation12 [shape = 'u8[8192]{0}', space=vmem, size = 0x2000, scoped, tag = 'input window, operand 14, single buffered']
    #allocation13 [shape = 's32[1]{0}', space=sflag, size = 0x4, scoped, tag = 'scoped memory for transformer_forward.1']
    #allocation14 [shape = 'u8[16384]{0}', space=vmem, size = 0x4000, scoped, tag = 'input window, operand 16, single buffered']
    #allocation15 [shape = 'u8[8192]{0}', space=vmem, size = 0x2000, scoped, tag = 'output window, operand 0, single buffered']
    %23 = vsyncpa [#allocation4], 0
    %24 = vsyncpa [#allocation7], 0
    %25 = vsyncpa [#allocation10], 0
    %26 = vsyncpa [#allocation13], 0
    %27 = vsyncpa [#allocation5], 0
    // Predicated region
    $region2: #{transformer_forward.1} parent=1 // pred_check
      _
    $region3: #{transformer_forward.1} parent=1 // pred_check_branch
      %29 = sbr.rel (0) target = $region5
    $region4: #{transformer_forward.1} parent=1 // pred_region
      %31 = vsyncadd [#allocation4], 0
      %s32 = sshll.u32 %s0, 4
      %s33 = int_to_ptr.hbm [resolvable:$true] %s32
      %s34 = sshll.u32 [#allocation3], 4
      %s35 = int_to_ptr.vmem [resolvable:$true] %s34
      %40 = dma.hbm_to_vmem [thread:$0]  %s33, 256, %s35, [#allocation4], 128, 128, 8
    $region5: #{transformer_forward.1} parent=1 // pred_fallthru
      _
    // Predicated region
    $region6: #{transformer_forward.1} parent=1 // pred_check
      _
    $region7: #{transformer_forward.1} parent=1 // pred_check_branch
      %42 = sbr.rel (0) target = $region9
    $region8: #{transformer_forward.1} parent=1 // pred_region
      _
    $region9: #{transformer_forward.1} parent=1 // pred_fallthru
      _
    // Predicated region
    $region10: #{transformer_forward.1} parent=1 // pred_check
      _
    $region11: #{transformer_forward.1} parent=1 // pred_check_branch
      %44 = sbr.rel (0) target = $region13
    $region12: #{transformer_forward.1} parent=1 // pred_region
      _
    $region13: #{transformer_forward.1} parent=1 // pred_fallthru
      _
    // Predicated region
    $region14: #{transformer_forward.1} parent=1 // pred_check
      _
    $region15: #{transformer_forward.1} parent=1 // pred_check_branch
      %46 = sbr.rel (0) target = $region17
    $region16: #{transformer_forward.1} parent=1 // pred_region
      _
    $region17: #{transformer_forward.1} parent=1 // pred_fallthru
      _
    // Predicated region
    $region18: #{transformer_forward.1} parent=1 // pred_check
      _
    $region19: #{transformer_forward.1} parent=1 // pred_check_branch
      %48 = sbr.rel (0) target = $region21
    $region20: #{transformer_forward.1} parent=1 // pred_region
      %50 = vsyncadd [#allocation7], 0
      %s51 = sshll.u32 %s4, 4
      %s52 = int_to_ptr.hbm [resolvable:$true] %s51
      %s53 = sshll.u32 [#allocation6], 4
      %s54 = int_to_ptr.vmem [resolvable:$true] %s53
      %59 = dma.hbm_to_vmem [thread:$0]  %s52, 512, %s54, [#allocation7], 64, 64, 4
    $region21: #{transformer_forward.1} parent=1 // pred_fallthru
      _
    // Predicated region
    $region22: #{transformer_forward.1} parent=1 // pred_check
      _
    $region23: #{transformer_forward.1} parent=1 // pred_check_branch
      %61 = sbr.rel (0) target = $region25
    $region24: #{transformer_forward.1} parent=1 // pred_region
      _
    $region25: #{transformer_forward.1} parent=1 // pred_fallthru
      _
    // Predicated region
    $region26: #{transformer_forward.1} parent=1 // pred_check
      _
    $region27: #{transformer_forward.1} parent=1 // pred_check_branch
      %63 = sbr.rel (0) target = $region29
    $region28: #{transformer_forward.1} parent=1 // pred_region
      %65 = vsyncadd [#allocation7], 0
      %s66 = sshll.u32 %s6, 4
      %s67 = int_to_ptr.hbm [resolvable:$true] %s66
      %s68 = sshll.u32 [#allocation8], 4
      %s69 = int_to_ptr.vmem [resolvable:$true] %s68
      %74 = dma.hbm_to_vmem [thread:$0]  %s67, 512, %s69, [#allocation7], 64, 64, 4
    $region29: #{transformer_forward.1} parent=1 // pred_fallthru
      _
    // Predicated region
    $region30: #{transformer_forward.1} parent=1 // pred_check
      _
    $region31: #{transformer_forward.1} parent=1 // pred_check_branch
      %76 = sbr.rel (0) target = $region33
    $region32: #{transformer_forward.1} parent=1 // pred_region
      _
    $region33: #{transformer_forward.1} parent=1 // pred_fallthru
      _
    // Predicated region
    $region34: #{transformer_forward.1} parent=1 // pred_check
      _
    $region35: #{transformer_forward.1} parent=1 // pred_check_branch
      %78 = sbr.rel (0) target = $region37
    $region36: #{transformer_forward.1} parent=1 // pred_region
      %80 = vsyncadd [#allocation10], 0
      %s81 = sshll.u32 %s8, 4
      %s82 = int_to_ptr.hbm [resolvable:$true] %s81
      %s83 = sshll.u32 [#allocation9], 4
      %s84 = int_to_ptr.vmem [resolvable:$true] %s83
      %89 = dma.hbm_to_vmem [thread:$0]  %s82, 512, %s84, [#allocation10], 64, 64, 4
    $region37: #{transformer_forward.1} parent=1 // pred_fallthru
      _
    // Predicated region
    $region38: #{transformer_forward.1} parent=1 // pred_check
      _
    $region39: #{transformer_forward.1} parent=1 // pred_check_branch
      %91 = sbr.rel (0) target = $region41
    $region40: #{transformer_forward.1} parent=1 // pred_region
      _
    $region41: #{transformer_forward.1} parent=1 // pred_fallthru
      _
    // Predicated region
    $region42: #{transformer_forward.1} parent=1 // pred_check
      _
    $region43: #{transformer_forward.1} parent=1 // pred_check_branch
      %93 = sbr.rel (0) target = $region45
    $region44: #{transformer_forward.1} parent=1 // pred_region
      %95 = vsyncadd [#allocation10], 0
      %s96 = sshll.u32 %s10, 4
      %s97 = int_to_ptr.hbm [resolvable:$true] %s96
      %s98 = sshll.u32 [#allocation11], 4
      %s99 = int_to_ptr.vmem [resolvable:$true] %s98
      %104 = dma.hbm_to_vmem [thread:$0]  %s97, 256, %s99, [#allocation10], 64, 64, 4
    $region45: #{transformer_forward.1} parent=1 // pred_fallthru
      _
    // Predicated region
    $region46: #{transformer_forward.1} parent=1 // pred_check
      _
    $region47: #{transformer_forward.1} parent=1 // pred_check_branch
      %106 = sbr.rel (0) target = $region49
    $region48: #{transformer_forward.1} parent=1 // pred_region
      _
    $region49: #{transformer_forward.1} parent=1 // pred_fallthru
      _
    // Predicated region
    $region50: #{transformer_forward.1} parent=1 // pred_check
      _
    $region51: #{transformer_forward.1} parent=1 // pred_check_branch
      %108 = sbr.rel (0) target = $region53
    $region52: #{transformer_forward.1} parent=1 // pred_region
      _
    $region53: #{transformer_forward.1} parent=1 // pred_fallthru
      _
    // Predicated region
    $region54: #{transformer_forward.1} parent=1 // pred_check
      _
    $region55: #{transformer_forward.1} parent=1 // pred_check_branch
      %110 = sbr.rel (0) target = $region57
    $region56: #{transformer_forward.1} parent=1 // pred_region
      _
    $region57: #{transformer_forward.1} parent=1 // pred_fallthru
      _
    // Predicated region
    $region58: #{transformer_forward.1} parent=1 // pred_check
      _
    $region59: #{transformer_forward.1} parent=1 // pred_check_branch
      %112 = sbr.rel (0) target = $region61
    $region60: #{transformer_forward.1} parent=1 // pred_region
      %114 = vsyncadd [#allocation13], 0
      %s115 = sshll.u32 %s14, 4
      %s116 = int_to_ptr.hbm [resolvable:$true] %s115
      %s117 = sshll.u32 [#allocation12], 4
      %s118 = int_to_ptr.vmem [resolvable:$true] %s117
      %123 = dma.hbm_to_vmem [thread:$0]  %s116, 256, %s118, [#allocation13], 64, 64, 4
    $region61: #{transformer_forward.1} parent=1 // pred_fallthru
      _
    // Predicated region
    $region62: #{transformer_forward.1} parent=1 // pred_check
      _
    $region63: #{transformer_forward.1} parent=1 // pred_check_branch
      %125 = sbr.rel (0) target = $region65
    $region64: #{transformer_forward.1} parent=1 // pred_region
      _
    $region65: #{transformer_forward.1} parent=1 // pred_fallthru
      _
    // Predicated region
    $region66: #{transformer_forward.1} parent=1 // pred_check
      _
    $region67: #{transformer_forward.1} parent=1 // pred_check_branch
      %127 = sbr.rel (0) target = $region69
    $region68: #{transformer_forward.1} parent=1 // pred_region
      %129 = vsyncadd [#allocation13], 0
      %s130 = sshll.u32 %s16, 4
      %s131 = int_to_ptr.hbm [resolvable:$true] %s130
      %s132 = sshll.u32 [#allocation14], 4
      %s133 = int_to_ptr.vmem [resolvable:$true] %s132
      %138 = dma.hbm_to_vmem [thread:$0]  %s131, 512, %s133, [#allocation13], 64, 64, 4
    $region69: #{transformer_forward.1} parent=1 // pred_fallthru
      _
    // Predicated region
    $region70: #{transformer_forward.1} parent=1 // pred_check
      _
    $region71: #{transformer_forward.1} parent=1 // pred_check_branch
      %140 = sbr.rel (0) target = $region73
    $region72: #{transformer_forward.1} parent=1 // pred_region
      _
    $region73: #{transformer_forward.1} parent=1 // pred_fallthru
      _
    // Predicated region
    $region74: #{transformer_forward.1} parent=1 // pred_check
      _
    $region75: #{transformer_forward.1} parent=1 // pred_check_branch
      %142 = sbr.rel (0) target = $region77
    $region76: #{transformer_forward.1} parent=1 // pred_region
      %144 = dma.done [#allocation4], 256
    $region77: #{transformer_forward.1} parent=1 // pred_fallthru
      _
    // Predicated region
    $region78: #{transformer_forward.1} parent=1 // pred_check
      _
    $region79: #{transformer_forward.1} parent=1 // pred_check_branch
      %146 = sbr.rel (0) target = $region81
    $region80: #{transformer_forward.1} parent=1 // pred_region
      %148 = dma.done [#allocation7], 512
    $region81: #{transformer_forward.1} parent=1 // pred_fallthru
      _
    // Predicated region
    $region82: #{transformer_forward.1} parent=1 // pred_check
      _
    $region83: #{transformer_forward.1} parent=1 // pred_check_branch
      %150 = sbr.rel (0) target = $region85
    $region84: #{transformer_forward.1} parent=1 // pred_region
      %152 = dma.done [#allocation7], 512
    $region85: #{transformer_forward.1} parent=1 // pred_fallthru
      _
    // Predicated region
    $region86: #{transformer_forward.1} parent=1 // pred_check
      _
    $region87: #{transformer_forward.1} parent=1 // pred_check_branch
      %154 = sbr.rel (0) target = $region89
    $region88: #{transformer_forward.1} parent=1 // pred_region
      %156 = dma.done [#allocation10], 512
    $region89: #{transformer_forward.1} parent=1 // pred_fallthru
      _
    // Predicated region
    $region90: #{transformer_forward.1} parent=1 // pred_check
      _
    $region91: #{transformer_forward.1} parent=1 // pred_check_branch
      %158 = sbr.rel (0) target = $region93
    $region92: #{transformer_forward.1} parent=1 // pred_region
      %160 = dma.done [#allocation10], 256
    $region93: #{transformer_forward.1} parent=1 // pred_fallthru
      _
    // Predicated region
    $region94: #{transformer_forward.1} parent=1 // pred_check
      _
    $region95: #{transformer_forward.1} parent=1 // pred_check_branch
      %162 = sbr.rel (0) target = $region97
    $region96: #{transformer_forward.1} parent=1 // pred_region
      %164 = dma.done [#allocation13], 256
    $region97: #{transformer_forward.1} parent=1 // pred_fallthru
      _
    // Predicated region
    $region98: #{transformer_forward.1} parent=1 // pred_check
      _
    $region99: #{transformer_forward.1} parent=1 // pred_check_branch
      %166 = sbr.rel (0) target = $region101
    $region100: #{transformer_forward.1} parent=1 // pred_region
      %168 = dma.done [#allocation13], 512
    $region101: #{transformer_forward.1} parent=1 // pred_fallthru
      _
    %v170 = vld [vmem:[#allocation3] sm:$0xff]
    %v171 = vld [vmem:[#allocation3 + $0x8] sm:$0xff]
    %v172 = vld [vmem:[%s1] sm:$0x3]
    %v173 = vsub.f32 1.0, %v172
    %v174 = vmul.f32 %v173, 1000000.0
    %v175 = vld [vmem:[%s2] sm:$0x1]
    %v176 = vld [vmem:[%s3] sm:$0x1]
    %vm177 = vcmask 261120
    %v178 = vsel %vm177, %v170, 0.0
    %179 = vadd.xlane.f32.xlu0 %v178
    %v180 = vpop.xlane.xlu0 %179
    %v181 = vsel %vm177, %v171, 0.0
    %182 = vadd.xlane.f32.xlu0 %v181
    %v183 = vpop.xlane.xlu0 %182
    %v184 = vrcp.pop 32.0
    %v185 = vmul.f32 32.0, %v184
    %v186 = vsub.f32 1.0, %v185
    %v187 = vmul.f32 %v184, %v186
    %v188 = vadd.f32 %v184, %v187
    %vm189 = vweird.f32 %v184
    %v190 = vsel %vm189, %v184, %v188
    %v191 = vmul.f32 %v180, %v190
    %v192 = vmul.f32 %v183, %v190
    %v193 = vsub.f32 %v170, %v191
    %v194 = vsub.f32 %v171, %v192
    %v195 = vmul.f32 %v193, %v193
    %v196 = vmul.f32 %v194, %v194
    %v197 = vsel %vm177, %v195, 0.0
    %198 = vadd.xlane.f32.xlu0 %v197
    %v199 = vpop.xlane.xlu0 %198
    %v200 = vsel %vm177, %v196, 0.0
    %201 = vadd.xlane.f32.xlu0 %v200
    %v202 = vpop.xlane.xlu0 %201
    %v203 = vmul.f32 %v199, %v190
    %v204 = vmul.f32 %v202, %v190
    %v205 = vadd.f32 %v203, 1e-05
    %v206 = vadd.f32 %v204, 1e-05
    %v207 = vrsqrt.pop %v205
    %v208 = vmul.f32 %v207, %v205
    %v209 = vmul.f32 %v208, %v207
    %v210 = vmul.f32 0.5, %v209
    %v211 = vsub.f32 1.5, %v210
    %v212 = vmul.f32 %v207, %v211
    %vm213 = vweird.f32 %v205
    %vm214 = vweird.f32 %v207
    %vm215 = vmor %vm213, %vm214
    %v216 = vsel %vm215, %v207, %v212
    %v217 = vrsqrt.pop %v206
    %v218 = vmul.f32 %v217, %v206
    %v219 = vmul.f32 %v218, %v217
    %v220 = vmul.f32 0.5, %v219
    %v221 = vsub.f32 1.5, %v220
    %v222 = vmul.f32 %v217, %v221
    %vm223 = vweird.f32 %v206
    %vm224 = vweird.f32 %v217
    %vm225 = vmor %vm223, %vm224
    %v226 = vsel %vm225, %v217, %v222
    %v227 = vmul.f32 %v193, %v216
    %v228 = vmul.f32 %v194, %v226
    %v230 = vperm.slane %v175, 0
    %v232 = vmul.f32 %v227, %v230
    %v233 = vmul.f32 %v228, %v230
    %v235 = vperm.slane %v176, 0
    %v237 = vadd.f32 %v232, %v235
    %v238 = vadd.f32 %v233, %v235
    %v239 = vpack.c.bf16 %v238, %v237
    %v240 = vld [vmem:[#allocation6] sm:$0xf]
    %v241 = vld [vmem:[#allocation6 + $0x4] sm:$0xf]
    %v242 = vld [vmem:[#allocation6 + $0x8] sm:$0xf]
    %v243 = vld [vmem:[#allocation6 + $0xc] sm:$0xf]
    %v244 = vld [vmem:[%s5] sm:$0x1]
    %v246 = vperm.slane %v244, 0
    %v252 = vunpack.c.l.b16 %v240
    %v253 = vunpack.c.l.b16 %v241
    %v254 = vunpack.c.l.b16 %v242
    %v255 = vunpack.c.l.b16 %v243
    %v256 = vpack.c.b16 %v253, %v252
    %v257 = vpack.c.b16 %v255, %v254
    %v261 = vsel %vm177, %v239, 0
    %263 = vmatpush.bf16.msra.mxu0 0
    %264 = vmatpush.bf16.msra.mxu0 0
    %265 = vmatpush.bf16.msra.mxu0 0
    %266 = vmatpush.bf16.msra.mxu0 0
    %267 = vmatpush.bf16.msra.mxu0 0
    %268 = vmatpush.bf16.msra.mxu0 0
    %269 = vmatpush.bf16.msra.mxu0 %v257
    %270 = vmatpush.bf16.msra.mxu0 %v256
    %271 = vmatmul.bf16.gmra.mxu0 %v261
    %v272 = vpop.f32.mrf.mxu0
    %v273 = vadd.f32 %v246, %v272
    %v274 = vpop.f32.mrf.mxu0
    %v275 = vadd.f32 %v246, %v274
    %276 = vdwg.mxu0
    %v277 = vpack.c.bf16 %v273, %v273
    %v278 = vpack.c.bf16 %v275, %v275
    %v279 = vld [vmem:[#allocation8] sm:$0xf]
    %v280 = vld [vmem:[#allocation8 + $0x4] sm:$0xf]
    %v281 = vld [vmem:[#allocation8 + $0x8] sm:$0xf]
    %v282 = vld [vmem:[#allocation8 + $0xc] sm:$0xf]
    %v283 = vld [vmem:[%s7] sm:$0x1]
    %v285 = vperm.slane %v283, 0
    %v291 = vunpack.c.l.b16 %v279
    %v292 = vunpack.c.l.b16 %v280
    %v293 = vunpack.c.l.b16 %v281
    %v294 = vunpack.c.l.b16 %v282
    %v295 = vpack.c.b16 %v292, %v291
    %v296 = vpack.c.b16 %v294, %v293
    %299 = vmatpush.bf16.msra.mxu0 0
    %300 = vmatpush.bf16.msra.mxu0 0
    %301 = vmatpush.bf16.msra.mxu0 0
    %302 = vmatpush.bf16.msra.mxu0 0
    %303 = vmatpush.bf16.msra.mxu0 0
    %304 = vmatpush.bf16.msra.mxu0 0
    %305 = vmatpush.bf16.msra.mxu0 %v296
    %306 = vmatpush.bf16.msra.mxu0 %v295
    %307 = vmatmul.bf16.gmra.mxu0 %v261
    %v308 = vpop.f32.mrf.mxu0
    %v309 = vadd.f32 %v285, %v308
    %v310 = vpop.f32.mrf.mxu0
    %v311 = vadd.f32 %v285, %v310
    %312 = vdwg.mxu0
    %v313 = vpack.c.bf16 %v309, %v309
    %v314 = vpack.c.bf16 %v311, %v311
    %v315 = vld [vmem:[#allocation9] sm:$0xf]
    %v316 = vld [vmem:[#allocation9 + $0x4] sm:$0xf]
    %v317 = vld [vmem:[#allocation9 + $0x8] sm:$0xf]
    %v318 = vld [vmem:[#allocation9 + $0xc] sm:$0xf]
    %v319 = vld [vmem:[%s9] sm:$0x1]
    %v321 = vperm.slane %v319, 0
    %v327 = vunpack.c.l.b16 %v315
    %v328 = vunpack.c.l.b16 %v316
    %v329 = vunpack.c.l.b16 %v317
    %v330 = vunpack.c.l.b16 %v318
    %v331 = vpack.c.b16 %v328, %v327
    %v332 = vpack.c.b16 %v330, %v329
    %335 = vmatpush.bf16.msra.mxu0 0
    %336 = vmatpush.bf16.msra.mxu0 0
    %337 = vmatpush.bf16.msra.mxu0 0
    %338 = vmatpush.bf16.msra.mxu0 0
    %339 = vmatpush.bf16.msra.mxu0 0
    %340 = vmatpush.bf16.msra.mxu0 0
    %341 = vmatpush.bf16.msra.mxu0 %v332
    %342 = vmatpush.bf16.msra.mxu0 %v331
    %343 = vmatmul.bf16.gmra.mxu0 %v261
    %v344 = vpop.f32.mrf.mxu0
    %v345 = vadd.f32 %v321, %v344
    %v346 = vpop.f32.mrf.mxu0
    %v347 = vadd.f32 %v321, %v346
    %348 = vdwg.mxu0
    %v349 = vpack.c.bf16 %v345, %v345
    %v350 = vpack.c.bf16 %v347, %v347
    %vm351 = vcmask 130048
    %v353 = vsel %vm351, %v277, 0
    %v356 = vsel %vm351, %v313, 0
    %358 = vmatpush.bf16.xpose.msra.mxu0 0
    %359 = vmatpush.bf16.xpose.msra.mxu0 0
    %360 = vmatpush.bf16.xpose.msra.mxu0 0
    %361 = vmatpush.bf16.xpose.msra.mxu0 0
    %362 = vmatpush.bf16.xpose.msra.mxu0 0
    %363 = vmatpush.bf16.xpose.msra.mxu0 0
    %364 = vmatpush.bf16.xpose.msra.mxu0 0
    %365 = vmatpush.bf16.xpose.msra.mxu0 %v356
    %366 = vmatmul.bf16.gmra.mxu0 %v353
    %v367 = vpop.f32.mrf.mxu0
    %v368 = vadd.f32 0.0, %v367
    %v369 = vpop.f32.mrf.mxu0
    %370 = vdwg.mxu0
    %v371 = vmul.f32 %v368, 0.25
    %v372 = vperm.slane %v174, 0
    %v373 = vsub.f32 %v371, %v372
    %vm374 = vcmask 64512
    %v375 = vsel %vm374, %v373, -inf
    %376 = vmax.xlane.f32.xlu0 %v375
    %v377 = vpop.xlane.xlu0 %376
    %v378 = vsub.f32 %v373, %v377
    %v379 = vmul.f32 %v378, 1.442695
    %v380 = vpow.pop %v379
    %v381 = vsel %vm374, %v380, 0.0
    %382 = vadd.xlane.f32.xlu0 %v381
    %v383 = vpop.xlane.xlu0 %382
    %v384 = vrcp.pop %v383
    %v385 = vmul.f32 %v380, %v384
    %v386 = vpack.c.bf16 %v385, %v385
    %v388 = vsel %vm374, %v386, 0
    %vm390 = vcmask 1043456
    %v392 = vsel %vm390, %v349, 0
    %394 = vmatpush.bf16.msra.mxu0 0
    %395 = vmatpush.bf16.msra.mxu0 0
    %396 = vmatpush.bf16.msra.mxu0 0
    %397 = vmatpush.bf16.msra.mxu0 0
    %398 = vmatpush.bf16.msra.mxu0 0
    %399 = vmatpush.bf16.msra.mxu0 0
    %400 = vmatpush.bf16.msra.mxu0 0
    %401 = vmatpush.bf16.msra.mxu0 %v392
    %402 = vmatmul.bf16.gmra.mxu0 %v388
    %v403 = vpop.f32.mrf.mxu0
    %v404 = vadd.f32 0.0, %v403
    %v405 = vpop.f32.mrf.mxu0
    %406 = vdwg.mxu0
    %407 = vst.msk [vmem:[#allocation2] sm:$0xff] %vm351, %v404
    %v409 = vsel %vm351, %v278, 0
    %v412 = vsel %vm351, %v314, 0
    %414 = vmatpush.bf16.xpose.msra.mxu0 0
    %415 = vmatpush.bf16.xpose.msra.mxu0 0
    %416 = vmatpush.bf16.xpose.msra.mxu0 0
    %417 = vmatpush.bf16.xpose.msra.mxu0 0
    %418 = vmatpush.bf16.xpose.msra.mxu0 0
    %419 = vmatpush.bf16.xpose.msra.mxu0 0
    %420 = vmatpush.bf16.xpose.msra.mxu0 0
    %421 = vmatpush.bf16.xpose.msra.mxu0 %v412
    %422 = vmatmul.bf16.gmra.mxu0 %v409
    %v423 = vpop.f32.mrf.mxu0
    %v424 = vadd.f32 0.0, %v423
    %v425 = vpop.f32.mrf.mxu0
    %426 = vdwg.mxu0
    %v427 = vmul.f32 %v424, 0.25
    %v428 = vperm.slane %v174, 1
    %v429 = vsub.f32 %v427, %v428
    %v430 = vsel %vm374, %v429, -inf
    %431 = vmax.xlane.f32.xlu0 %v430
    %v432 = vpop.xlane.xlu0 %431
    %v433 = vsub.f32 %v429, %v432
    %v434 = vmul.f32 %v433, 1.442695
    %v435 = vpow.pop %v434
    %v436 = vsel %vm374, %v435, 0.0
    %437 = vadd.xlane.f32.xlu0 %v436
    %v438 = vpop.xlane.xlu0 %437
    %v439 = vrcp.pop %v438
    %v440 = vmul.f32 %v435, %v439
    %v441 = vpack.c.bf16 %v440, %v440
    %v443 = vsel %vm374, %v441, 0
    %v446 = vsel %vm390, %v350, 0
    %448 = vmatpush.bf16.msra.mxu0 0
    %449 = vmatpush.bf16.msra.mxu0 0
    %450 = vmatpush.bf16.msra.mxu0 0
    %451 = vmatpush.bf16.msra.mxu0 0
    %452 = vmatpush.bf16.msra.mxu0 0
    %453 = vmatpush.bf16.msra.mxu0 0
    %454 = vmatpush.bf16.msra.mxu0 0
    %455 = vmatpush.bf16.msra.mxu0 %v446
    %456 = vmatmul.bf16.gmra.mxu0 %v443
    %v457 = vpop.f32.mrf.mxu0
    %v458 = vadd.f32 0.0, %v457
    %v459 = vpop.f32.mrf.mxu0
    %460 = vdwg.mxu0
    %461 = vst.msk [vmem:[#allocation2 + $0x8] sm:$0xff] %vm351, %v458
    %s462 = scalar_lea.vmem [#allocation6], 16
    %v463 = vld [vmem:[%s462] sm:$0xf]
    %v464 = vld [vmem:[%s462 + $0x4] sm:$0xf]
    %v465 = vld [vmem:[%s462 + $0x8] sm:$0xf]
    %v466 = vld [vmem:[%s462 + $0xc] sm:$0xf]
    %s467 = scalar_lea.vmem %s5, 1
    %v468 = vld [vmem:[%s467] sm:$0x1]
    %v470 = vperm.slane %v468, 0
    %v476 = vunpack.c.l.b16 %v463
    %v477 = vunpack.c.l.b16 %v464
    %v478 = vunpack.c.l.b16 %v465
    %v479 = vunpack.c.l.b16 %v466
    %v480 = vpack.c.b16 %v477, %v476
    %v481 = vpack.c.b16 %v479, %v478
    %484 = vmatpush.bf16.msra.mxu0 0
    %485 = vmatpush.bf16.msra.mxu0 0
    %486 = vmatpush.bf16.msra.mxu0 0
    %487 = vmatpush.bf16.msra.mxu0 0
    %488 = vmatpush.bf16.msra.mxu0 0
    %489 = vmatpush.bf16.msra.mxu0 0
    %490 = vmatpush.bf16.msra.mxu0 %v481
    %491 = vmatpush.bf16.msra.mxu0 %v480
    %492 = vmatmul.bf16.gmra.mxu0 %v261
    %v493 = vpop.f32.mrf.mxu0
    %v494 = vadd.f32 %v470, %v493
    %v495 = vpop.f32.mrf.mxu0
    %v496 = vadd.f32 %v470, %v495
    %497 = vdwg.mxu0
    %v498 = vpack.c.bf16 %v494, %v494
    %v499 = vpack.c.bf16 %v496, %v496
    %s500 = scalar_lea.vmem [#allocation8], 16
    %v501 = vld [vmem:[%s500] sm:$0xf]
    %v502 = vld [vmem:[%s500 + $0x4] sm:$0xf]
    %v503 = vld [vmem:[%s500 + $0x8] sm:$0xf]
    %v504 = vld [vmem:[%s500 + $0xc] sm:$0xf]
    %s505 = scalar_lea.vmem %s7, 1
    %v506 = vld [vmem:[%s505] sm:$0x1]
    %v508 = vperm.slane %v506, 0
    %v514 = vunpack.c.l.b16 %v501
    %v515 = vunpack.c.l.b16 %v502
    %v516 = vunpack.c.l.b16 %v503
    %v517 = vunpack.c.l.b16 %v504
    %v518 = vpack.c.b16 %v515, %v514
    %v519 = vpack.c.b16 %v517, %v516
    %522 = vmatpush.bf16.msra.mxu0 0
    %523 = vmatpush.bf16.msra.mxu0 0
    %524 = vmatpush.bf16.msra.mxu0 0
    %525 = vmatpush.bf16.msra.mxu0 0
    %526 = vmatpush.bf16.msra.mxu0 0
    %527 = vmatpush.bf16.msra.mxu0 0
    %528 = vmatpush.bf16.msra.mxu0 %v519
    %529 = vmatpush.bf16.msra.mxu0 %v518
    %530 = vmatmul.bf16.gmra.mxu0 %v261
    %v531 = vpop.f32.mrf.mxu0
    %v532 = vadd.f32 %v508, %v531
    %v533 = vpop.f32.mrf.mxu0
    %v534 = vadd.f32 %v508, %v533
    %535 = vdwg.mxu0
    %v536 = vpack.c.bf16 %v532, %v532
    %v537 = vpack.c.bf16 %v534, %v534
    %s538 = scalar_lea.vmem [#allocation9], 16
    %v539 = vld [vmem:[%s538] sm:$0xf]
    %v540 = vld [vmem:[%s538 + $0x4] sm:$0xf]
    %v541 = vld [vmem:[%s538 + $0x8] sm:$0xf]
    %v542 = vld [vmem:[%s538 + $0xc] sm:$0xf]
    %s543 = scalar_lea.vmem %s9, 1
    %v544 = vld [vmem:[%s543] sm:$0x1]
    %v546 = vperm.slane %v544, 0
    %v552 = vunpack.c.l.b16 %v539
    %v553 = vunpack.c.l.b16 %v540
    %v554 = vunpack.c.l.b16 %v541
    %v555 = vunpack.c.l.b16 %v542
    %v556 = vpack.c.b16 %v553, %v552
    %v557 = vpack.c.b16 %v555, %v554
    %560 = vmatpush.bf16.msra.mxu0 0
    %561 = vmatpush.bf16.msra.mxu0 0
    %562 = vmatpush.bf16.msra.mxu0 0
    %563 = vmatpush.bf16.msra.mxu0 0
    %564 = vmatpush.bf16.msra.mxu0 0
    %565 = vmatpush.bf16.msra.mxu0 0
    %566 = vmatpush.bf16.msra.mxu0 %v557
    %567 = vmatpush.bf16.msra.mxu0 %v556
    %568 = vmatmul.bf16.gmra.mxu0 %v261
    %v569 = vpop.f32.mrf.mxu0
    %v570 = vadd.f32 %v546, %v569
    %v571 = vpop.f32.mrf.mxu0
    %v572 = vadd.f32 %v546, %v571
    %573 = vdwg.mxu0
    %v574 = vpack.c.bf16 %v570, %v570
    %v575 = vpack.c.bf16 %v572, %v572
    %v577 = vsel %vm351, %v498, 0
    %v580 = vsel %vm351, %v536, 0
    %582 = vmatpush.bf16.xpose.msra.mxu0 0
    %583 = vmatpush.bf16.xpose.msra.mxu0 0
    %584 = vmatpush.bf16.xpose.msra.mxu0 0
    %585 = vmatpush.bf16.xpose.msra.mxu0 0
    %586 = vmatpush.bf16.xpose.msra.mxu0 0
    %587 = vmatpush.bf16.xpose.msra.mxu0 0
    %588 = vmatpush.bf16.xpose.msra.mxu0 0
    %589 = vmatpush.bf16.xpose.msra.mxu0 %v580
    %590 = vmatmul.bf16.gmra.mxu0 %v577
    %v591 = vpop.f32.mrf.mxu0
    %v592 = vadd.f32 0.0, %v591
    %v593 = vpop.f32.mrf.mxu0
    %594 = vdwg.mxu0
    %v595 = vmul.f32 %v592, 0.25
    %v596 = vsub.f32 %v595, %v372
    %v597 = vsel %vm374, %v596, -inf
    %598 = vmax.xlane.f32.xlu0 %v597
    %v599 = vpop.xlane.xlu0 %598
    %v600 = vsub.f32 %v596, %v599
    %v601 = vmul.f32 %v600, 1.442695
    %v602 = vpow.pop %v601
    %v603 = vsel %vm374, %v602, 0.0
    %604 = vadd.xlane.f32.xlu0 %v603
    %v605 = vpop.xlane.xlu0 %604
    %v606 = vrcp.pop %v605
    %v607 = vmul.f32 %v602, %v606
    %v608 = vpack.c.bf16 %v607, %v607
    %v610 = vsel %vm374, %v608, 0
    %v613 = vsel %vm390, %v574, 0
    %615 = vmatpush.bf16.msra.mxu0 0
    %616 = vmatpush.bf16.msra.mxu0 0
    %617 = vmatpush.bf16.msra.mxu0 0
    %618 = vmatpush.bf16.msra.mxu0 0
    %619 = vmatpush.bf16.msra.mxu0 0
    %620 = vmatpush.bf16.msra.mxu0 0
    %621 = vmatpush.bf16.msra.mxu0 0
    %622 = vmatpush.bf16.msra.mxu0 %v613
    %623 = vmatmul.bf16.gmra.mxu0 %v610
    %v624 = vpop.f32.mrf.mxu0
    %v625 = vadd.f32 0.0, %v624
    %v626 = vpop.f32.mrf.mxu0
    %627 = vdwg.mxu0
    %629 = vrot.lane.b32.xlu0 %v625, 16
    %v630 = vpop.permute.xlu0 %629
    %vm632 = vcmask 261248
    %633 = vst.msk [vmem:[#allocation2] sm:$0xff] %vm632, %v630
    %v635 = vsel %vm351, %v499, 0
    %v638 = vsel %vm351, %v537, 0
    %640 = vmatpush.bf16.xpose.msra.mxu0 0
    %641 = vmatpush.bf16.xpose.msra.mxu0 0
    %642 = vmatpush.bf16.xpose.msra.mxu0 0
    %643 = vmatpush.bf16.xpose.msra.mxu0 0
    %644 = vmatpush.bf16.xpose.msra.mxu0 0
    %645 = vmatpush.bf16.xpose.msra.mxu0 0
    %646 = vmatpush.bf16.xpose.msra.mxu0 0
    %647 = vmatpush.bf16.xpose.msra.mxu0 %v638
    %648 = vmatmul.bf16.gmra.mxu0 %v635
    %v649 = vpop.f32.mrf.mxu0
    %v650 = vadd.f32 0.0, %v649
    %v651 = vpop.f32.mrf.mxu0
    %652 = vdwg.mxu0
    %v653 = vmul.f32 %v650, 0.25
    %v654 = vsub.f32 %v653, %v428
    %v655 = vsel %vm374, %v654, -inf
    %656 = vmax.xlane.f32.xlu0 %v655
    %v657 = vpop.xlane.xlu0 %656
    %v658 = vsub.f32 %v654, %v657
    %v659 = vmul.f32 %v658, 1.442695
    %v660 = vpow.pop %v659
    %v661 = vsel %vm374, %v660, 0.0
    %662 = vadd.xlane.f32.xlu0 %v661
    %v663 = vpop.xlane.xlu0 %662
    %v664 = vrcp.pop %v663
    %v665 = vmul.f32 %v660, %v664
    %v666 = vpack.c.bf16 %v665, %v665
    %v668 = vsel %vm374, %v666, 0
    %v671 = vsel %vm390, %v575, 0
    %673 = vmatpush.bf16.msra.mxu0 0
    %674 = vmatpush.bf16.msra.mxu0 0
    %675 = vmatpush.bf16.msra.mxu0 0
    %676 = vmatpush.bf16.msra.mxu0 0
    %677 = vmatpush.bf16.msra.mxu0 0
    %678 = vmatpush.bf16.msra.mxu0 0
    %679 = vmatpush.bf16.msra.mxu0 0
    %680 = vmatpush.bf16.msra.mxu0 %v671
    %681 = vmatmul.bf16.gmra.mxu0 %v668
    %v682 = vpop.f32.mrf.mxu0
    %v683 = vadd.f32 0.0, %v682
    %v684 = vpop.f32.mrf.mxu0
    %685 = vdwg.mxu0
    %687 = vrot.lane.b32.xlu0 %v683, 16
    %v688 = vpop.permute.xlu0 %687
    %690 = vst.msk [vmem:[#allocation2 + $0x8] sm:$0xff] %vm632, %v688
    %v691 = vld [vmem:[#allocation2] sm:$0xff]
    %v692 = vld [vmem:[#allocation2 + $0x8] sm:$0xff]
    %v693 = vpack.c.bf16 %v692, %v691
    %v694 = vld [vmem:[#allocation11] sm:$0xf]
    %v695 = vld [vmem:[#allocation11 + $0x4] sm:$0xf]
    %v696 = vld [vmem:[#allocation11 + $0x8] sm:$0xf]
    %v697 = vld [vmem:[#allocation11 + $0xc] sm:$0xf]
    %v698 = vld [vmem:[%s11] sm:$0x1]
    %v700 = vperm.slane %v698, 0
    %v706 = vunpack.c.l.b16 %v694
    %v707 = vunpack.c.l.b16 %v695
    %v708 = vunpack.c.l.b16 %v696
    %v709 = vunpack.c.l.b16 %v697
    %v710 = vpack.c.b16 %v707, %v706
    %v711 = vpack.c.b16 %v709, %v708
    %v715 = vsel %vm177, %v693, 0
    %717 = vmatpush.bf16.msra.mxu0 0
    %718 = vmatpush.bf16.msra.mxu0 0
    %719 = vmatpush.bf16.msra.mxu0 0
    %720 = vmatpush.bf16.msra.mxu0 0
    %721 = vmatpush.bf16.msra.mxu0 0
    %722 = vmatpush.bf16.msra.mxu0 0
    %723 = vmatpush.bf16.msra.mxu0 %v711
    %724 = vmatpush.bf16.msra.mxu0 %v710
    %725 = vmatmul.bf16.gmra.mxu0 %v715
    %v726 = vpop.f32.mrf.mxu0
    %v727 = vadd.f32 %v700, %v726
    %v728 = vpop.f32.mrf.mxu0
    %v729 = vadd.f32 %v700, %v728
    %730 = vdwg.mxu0
    %v731 = vadd.f32 %v727, %v170
    %v732 = vadd.f32 %v729, %v171
    %v733 = vld [vmem:[%s12] sm:$0x1]
    %v734 = vld [vmem:[%s13] sm:$0x1]
    %v735 = vsel %vm177, %v731, 0.0
    %736 = vadd.xlane.f32.xlu0 %v735
    %v737 = vpop.xlane.xlu0 %736
    %v738 = vsel %vm177, %v732, 0.0
    %739 = vadd.xlane.f32.xlu0 %v738
    %v740 = vpop.xlane.xlu0 %739
    %v741 = vmul.f32 %v737, %v190
    %v742 = vmul.f32 %v740, %v190
    %v743 = vsub.f32 %v731, %v741
    %v744 = vsub.f32 %v732, %v742
    %v745 = vmul.f32 %v743, %v743
    %v746 = vmul.f32 %v744, %v744
    %v747 = vsel %vm177, %v745, 0.0
    %748 = vadd.xlane.f32.xlu0 %v747
    %v749 = vpop.xlane.xlu0 %748
    %v750 = vsel %vm177, %v746, 0.0
    %751 = vadd.xlane.f32.xlu0 %v750
    %v752 = vpop.xlane.xlu0 %751
    %v753 = vmul.f32 %v749, %v190
    %v754 = vmul.f32 %v752, %v190
    %v755 = vadd.f32 %v753, 1e-05
    %v756 = vadd.f32 %v754, 1e-05
    %v757 = vrsqrt.pop %v755
    %v758 = vmul.f32 %v757, %v755
    %v759 = vmul.f32 %v758, %v757
    %v760 = vmul.f32 0.5, %v759
    %v761 = vsub.f32 1.5, %v760
    %v762 = vmul.f32 %v757, %v761
    %vm763 = vweird.f32 %v755
    %vm764 = vweird.f32 %v757
    %vm765 = vmor %vm763, %vm764
    %v766 = vsel %vm765, %v757, %v762
    %v767 = vrsqrt.pop %v756
    %v768 = vmul.f32 %v767, %v756
    %v769 = vmul.f32 %v768, %v767
    %v770 = vmul.f32 0.5, %v769
    %v771 = vsub.f32 1.5, %v770
    %v772 = vmul.f32 %v767, %v771
    %vm773 = vweird.f32 %v756
    %vm774 = vweird.f32 %v767
    %vm775 = vmor %vm773, %vm774
    %v776 = vsel %vm775, %v767, %v772
    %v777 = vmul.f32 %v743, %v766
    %v778 = vmul.f32 %v744, %v776
    %v780 = vperm.slane %v733, 0
    %v782 = vmul.f32 %v777, %v780
    %v783 = vmul.f32 %v778, %v780
    %v785 = vperm.slane %v734, 0
    %v787 = vadd.f32 %v782, %v785
    %v788 = vadd.f32 %v783, %v785
    %v789 = vpack.c.bf16 %v788, %v787
    %v790 = vld [vmem:[#allocation12] sm:$0xf]
    %v791 = vld [vmem:[#allocation12 + $0x4] sm:$0xf]
    %v792 = vld [vmem:[#allocation12 + $0x8] sm:$0xf]
    %v793 = vld [vmem:[#allocation12 + $0xc] sm:$0xf]
    %v794 = vld [vmem:[%s15] sm:$0x1]
    %v796 = vperm.slane %v794, 0
    %v802 = vunpack.c.l.b16 %v790
    %v803 = vunpack.c.l.b16 %v791
    %v804 = vunpack.c.l.b16 %v792
    %v805 = vunpack.c.l.b16 %v793
    %v806 = vpack.c.b16 %v803, %v802
    %v807 = vpack.c.b16 %v805, %v804
    %v811 = vsel %vm177, %v789, 0
    %813 = vmatpush.bf16.msra.mxu0 0
    %814 = vmatpush.bf16.msra.mxu0 0
    %815 = vmatpush.bf16.msra.mxu0 0
    %816 = vmatpush.bf16.msra.mxu0 0
    %817 = vmatpush.bf16.msra.mxu0 0
    %818 = vmatpush.bf16.msra.mxu0 0
    %819 = vmatpush.bf16.msra.mxu0 %v807
    %820 = vmatpush.bf16.msra.mxu0 %v806
    %821 = vmatmul.bf16.gmra.mxu0 %v811
    %v822 = vpop.f32.mrf.mxu0
    %v823 = vadd.f32 %v796, %v822
    %v824 = vpop.f32.mrf.mxu0
    %v825 = vadd.f32 %v796, %v824
    %826 = vdwg.mxu0
    %v827 = vmul.f32 %v823, %v823
    %v828 = vmul.f32 %v825, %v825
    %v829 = vmul.f32 %v823, %v827
    %v830 = vmul.f32 %v825, %v828
    %v831 = vmul.f32 %v829, 0.044715
    %v832 = vmul.f32 %v830, 0.044715
    %v833 = vadd.f32 %v823, %v831
    %v834 = vadd.f32 %v825, %v832
    %v835 = vmul.f32 %v833, 0.7978846
    %v836 = vmul.f32 %v834, 0.7978846
    %v837 = vtanh.pop %v835
    %v838 = vtanh.pop %v836
    %v839 = vadd.f32 %v837, 1.0
    %v840 = vadd.f32 %v838, 1.0
    %v841 = vmul.f32 %v839, 0.5
    %v842 = vmul.f32 %v840, 0.5
    %v843 = vmul.f32 %v823, %v841
    %v844 = vmul.f32 %v825, %v842
    %v845 = vpack.c.bf16 %v844, %v843
    %v846 = vld [vmem:[#allocation14] sm:$0xf]
    %v847 = vld [vmem:[#allocation14 + $0x4] sm:$0xf]
    %v848 = vld [vmem:[#allocation14 + $0x8] sm:$0xf]
    %v849 = vld [vmem:[#allocation14 + $0xc] sm:$0xf]
    %v850 = vld [vmem:[#allocation14 + $0x10] sm:$0xf]
    %v851 = vld [vmem:[#allocation14 + $0x14] sm:$0xf]
    %v852 = vld [vmem:[#allocation14 + $0x18] sm:$0xf]
    %v853 = vld [vmem:[#allocation14 + $0x1c] sm:$0xf]
    %v854 = vld [vmem:[%s17] sm:$0x1]
    %v856 = vperm.slane %v854, 0
    %v866 = vunpack.c.l.b16 %v846
    %v867 = vunpack.c.l.b16 %v847
    %v868 = vunpack.c.l.b16 %v848
    %v869 = vunpack.c.l.b16 %v849
    %v870 = vunpack.c.l.b16 %v850
    %v871 = vunpack.c.l.b16 %v851
    %v872 = vunpack.c.l.b16 %v852
    %v873 = vunpack.c.l.b16 %v853
    %v874 = vpack.c.b16 %v867, %v866
    %v875 = vpack.c.b16 %v869, %v868
    %v876 = vpack.c.b16 %v871, %v870
    %v877 = vpack.c.b16 %v873, %v872
    %vm882 = vcmask 523264
    %v884 = vsel %vm882, %v845, 0
    %886 = vmatpush.bf16.msra.mxu0 0
    %887 = vmatpush.bf16.msra.mxu0 0
    %888 = vmatpush.bf16.msra.mxu0 0
    %889 = vmatpush.bf16.msra.mxu0 0
    %890 = vmatpush.bf16.msra.mxu0 %v877
    %891 = vmatpush.bf16.msra.mxu0 %v876
    %892 = vmatpush.bf16.msra.mxu0 %v875
    %893 = vmatpush.bf16.msra.mxu0 %v874
    %894 = vmatmul.bf16.gmra.mxu0 %v884
    %v895 = vpop.f32.mrf.mxu0
    %v896 = vadd.f32 %v856, %v895
    %v897 = vpop.f32.mrf.mxu0
    %v898 = vadd.f32 %v856, %v897
    %899 = vdwg.mxu0
    %v900 = vadd.f32 %v896, %v731
    %v901 = vadd.f32 %v898, %v732
    %902 = vst.msk [vmem:[#allocation15] sm:$0xff] %vm177, %v900
    %903 = vst.msk [vmem:[#allocation15 + $0x8] sm:$0xff] %vm177, %v901
    // Predicated region
    $region102: #{transformer_forward.1} parent=1 // pred_check
      _
    $region103: #{transformer_forward.1} parent=1 // pred_check_branch
      %905 = sbr.rel (0) target = $region105
    $region104: #{transformer_forward.1} parent=1 // pred_region
      %907 = vsyncadd [#allocation5], 0
      %s908 = sshll.u32 [#allocation15], 4
      %s909 = int_to_ptr.vmem [resolvable:$true] %s908
      %s910 = sshll.u32 %s18, 4
      %s911 = int_to_ptr.hbm [resolvable:$true] %s910
      %916 = dma.vmem_to_hbm [thread:$0]  %s909, 256, %s911, [#allocation5], 128, 128, 8
    $region105: #{transformer_forward.1} parent=1 // pred_fallthru
      _
    // Predicated region
    $region106: #{transformer_forward.1} parent=1 // pred_check
      _
    $region107: #{transformer_forward.1} parent=1 // pred_check_branch
      %918 = sbr.rel (0) target = $region109
    $region108: #{transformer_forward.1} parent=1 // pred_region
      %920 = dma.done [#allocation5], 256
    $region109: #{transformer_forward.1} parent=1 // pred_fallthru
      _
    %921 = vsyncpa [#allocation4], 1
    %922 = vsyncpa [#allocation7], 1
    %923 = vsyncpa [#allocation10], 1
    %924 = vsyncpa [#allocation13], 1
    %925 = vsyncpa [#allocation5], 1

</llo_original>
